<compile_context>
chip_gen: v5e
topology: v5e:2x2
jax: 0.10.0
libtpu: 0.0.40
codegen_flags: <defaults>
</compile_context>

<pallas_src>
import functools

import jax
import jax.numpy as jnp
from jax.experimental import pallas as pl
from jax.experimental.pallas import tpu as pltpu


def _round_up(x, m):
    return ((x + m - 1) // m) * m


# --------------------------------------------------------------------------- #
# Kernel
# --------------------------------------------------------------------------- #
def _fc_kernel(x_ref, w1_ref, b1_ref, w2_ref, b2_ref, w3_ref, b3_ref, o_ref,
               *, num_class):
    x = x_ref[...]                               # (TM, D_in) bf16

    # fc1 + ReLU   (bf16 x bf16 -> f32 accumulation on the MXU)
    h1 = jnp.dot(x, w1_ref[...], preferred_element_type=jnp.float32) + b1_ref[...]
    h1 = jnp.maximum(h1, 0.0)

    # fc2 + ReLU
    h2 = jnp.dot(h1.astype(jnp.bfloat16), w2_ref[...],
                 preferred_element_type=jnp.float32) + b2_ref[...]
    h2 = jnp.maximum(h2, 0.0)

    # fc3 -> logits over the padded 128-lane class axis
    logits = jnp.dot(h2.astype(jnp.bfloat16), w3_ref[...],
                     preferred_element_type=jnp.float32) + b3_ref[...]

    # Mask padded class lanes so they do not corrupt the softmax denominator,
    # then numerically-stable log_softmax over dim=1.
    col = jax.lax.broadcasted_iota(jnp.int32, logits.shape, dimension=1)
    logits = jnp.where(col < num_class, logits, jnp.float32(-1e30))

    m = jnp.max(logits, axis=-1, keepdims=True)
    z = logits - m
    lse = jnp.log(jnp.sum(jnp.exp(z), axis=-1, keepdims=True))
    o_ref[...] = (z - lse).astype(o_ref.dtype)


# --------------------------------------------------------------------------- #
# One-time parameter preparation (hoisted out of the forward pass)
# --------------------------------------------------------------------------- #
def prepare_params(params):
    """Zero-pad feature dims to lane multiples and cast matmul operands to bf16.
    Run once; reuse the result across forward calls."""
    w1, b1 = params["w1"], params["b1"]
    w2, b2 = params["w2"], params["b2"]
    w3, b3 = params["w3"], params["b3"]

    D_in = w1.shape[0]
    H1 = _round_up(w1.shape[1], 128)      # 300 -> 384
    H2 = _round_up(w2.shape[1], 128)      # 100 -> 128
    NC = _round_up(w3.shape[1], 128)      # 10  -> 128

    def pad2(a, rows, cols):
        return jnp.pad(a, ((0, rows - a.shape[0]), (0, cols - a.shape[1])))

    return {
        "w1": pad2(w1, D_in, H1).astype(jnp.bfloat16),
        "b1": pad2(b1, 1, H1).astype(jnp.float32),
        "w2": pad2(w2, H1, H2).astype(jnp.bfloat16),
        "b2": pad2(b2, 1, H2).astype(jnp.float32),
        "w3": pad2(w3, H2, NC).astype(jnp.bfloat16),
        "b3": pad2(b3, 1, NC).astype(jnp.float32),
    }


# --------------------------------------------------------------------------- #
# Forward wrapper
# --------------------------------------------------------------------------- #
def _pick_tm(B, D_in, NC, resident_weight_bytes):
    # bf16 rows pack in sublane pairs -> tile to a multiple of 16; allow up to
    # 512 rows per step to amortize the ~0.35 us per-grid-step overhead.
    TM = min(512, _round_up(B, 16))
    # Keep >= 2 grid steps when the batch allows it so
    # dimension_semantics=("parallel",) can use both v7x TensorCores.
    if B >= 32 and _round_up(B, TM) // TM < 2:
        TM = _round_up((B + 1) // 2, 16)
    # VMEM budget (v7x default scoped limit is 32 MiB): the double-buffered x
    # tile dominates for large D_in; keep comfortable headroom.
    per_row_bytes = 2 * (D_in * 2) + 2 * (NC * 4)   # x tile (x2 bufs) + out tile (x2 bufs)
    budget = 24 * 1024 * 1024 - resident_weight_bytes
    tm_cap = max(16, (budget // per_row_bytes) // 16 * 16)
    return max(16, min(TM, tm_cap))


def fc_forward(x_nchw, prepped, *, num_class):
    B = x_nchw.shape[0]
    # Same as torch .view(B, -1); cast to bf16 BEFORE padding so the wrapper
    # never materializes a padded f32 copy of x.
    x2d = x_nchw.reshape(B, -1)
    if x2d.dtype != jnp.bfloat16:
        x2d = x2d.astype(jnp.bfloat16)

    w1p, b1p = prepped["w1"], prepped["b1"]
    w2p, b2p = prepped["w2"], prepped["b2"]
    w3p, b3p = prepped["w3"], prepped["b3"]

    D_in = x2d.shape[1]
    assert w1p.shape[0] == D_in, "prepared params do not match flattened input size"
    H1, H2, NC = w1p.shape[1], w2p.shape[1], w3p.shape[1]

    resident_weight_bytes = (
        (w1p.size + w2p.size + w3p.size) * 2
        + (b1p.size + b2p.size + b3p.size) * 4)

    TM = _pick_tm(B, D_in, NC, resident_weight_bytes)
    B_pad = _round_up(B, TM)
    if B_pad != B:                      # skip the pad copy when already aligned
        x2d = jnp.pad(x2d, ((0, B_pad - B), (0, 0)))
    grid = (B_pad // TM,)

    # weights/biases: constant index_map -> DMA'd once and resident in VMEM;
    # single-buffered since their block index never changes.
    def const(shape):
        return pl.BlockSpec(shape, lambda i: (0, 0), pipeline_mode=pl.Buffered(1))

    flops = 2 * B_pad * (D_in * H1 + H1 * H2 + H2 * NC)
    bytes_accessed = x2d.size * 2 + resident_weight_bytes + B_pad * NC * 4

    out = pl.pallas_call(
        functools.partial(_fc_kernel, num_class=num_class),
        out_shape=jax.ShapeDtypeStruct((B_pad, NC), jnp.float32),
        grid=grid,
        in_specs=[
            pl.BlockSpec((TM, D_in), lambda i: (i, 0)),   # x tile
            const((D_in, H1)), const((1, H1)),            # w1, b1
            const((H1, H2)),   const((1, H2)),            # w2, b2
            const((H2, NC)),   const((1, NC)),            # w3, b3
        ],
        out_specs=pl.BlockSpec((TM, NC), lambda i: (i, 0)),
        compiler_params=pltpu.CompilerParams(
            dimension_semantics=("parallel",)),
        cost_estimate=pl.CostEstimate(
            flops=flops,
            transcendentals=B_pad * NC,
            bytes_accessed=bytes_accessed),
    )(x2d, w1p, b1p, w2p, b2p, w3p, b3p)

    # strip batch / class padding (layout plumbing only)
    return out[:B, :num_class]


# --------------------------------------------------------------------------- #
# Init mimicking nn.Linear's uniform(-1/sqrt(fan_in), 1/sqrt(fan_in))
# --------------------------------------------------------------------------- #
def init_params(key, d_in, num_class):
    ks = jax.random.split(key, 6)

    def linear(kw, kb, fan_in, fan_out):
        bound = 1.0 / jnp.sqrt(fan_in)
        w = jax.random.uniform(kw, (fan_in, fan_out), jnp.float32, -bound, bound)
        b = jax.random.uniform(kb, (1, fan_out), jnp.float32, -bound, bound)
        return w, b

    w1, b1 = linear(ks[0], ks[1], d_in, 300)
    w2, b2 = linear(ks[2], ks[3], 300, 100)
    w3, b3 = linear(ks[4], ks[5], 100, num_class)
    return {"w1": w1, "b1": b1, "w2": w2, "b2": b2, "w3": w3, "b3": b3}


if __name__ == "__main__":
    key = jax.random.PRNGKey(0)
    kx, kp = jax.random.split(key)

    # params.input_channel=4, input_h=16, input_w=16, num_class=10
    B, C, H, W = 2, 4, 16, 16
    num_class = 10
    d_in = C * H * W

    x = jax.random.normal(kx, (B, C, H, W), jnp.float32)
    params = init_params(kp, d_in, num_class)

    # one-time weight prep (hoisted out of the per-call forward)
    prepped = jax.block_until_ready(prepare_params(params))

    fwd = jax.jit(functools.partial(fc_forward, num_class=num_class))
    out = jax.block_until_ready(fwd(x, prepped))

    # sanity: shape and log_softmax normalization (rows sum to 1 in prob space)
    assert out.shape == (B, num_class)
    row_sums = jnp.sum(jnp.exp(out), axis=1)
    assert jnp.allclose(row_sums, jnp.ones((B,)), atol=1e-3)

    x2d = x.reshape(B, -1).astype(jnp.float32)

    # reference mirroring the kernel's bf16-operand / f32-accumulation path
    def ref_bf16(x2d):
        xb = x2d.astype(jnp.bfloat16)
        h1 = jnp.maximum(
            jnp.dot(xb, params["w1"].astype(jnp.bfloat16),
                    preferred_element_type=jnp.float32) + params["b1"], 0.0)
        h2 = jnp.maximum(
            jnp.dot(h1.astype(jnp.bfloat16), params["w2"].astype(jnp.bfloat16),
                    preferred_element_type=jnp.float32) + params["b2"], 0.0)
        lg = jnp.dot(h2.astype(jnp.bfloat16), params["w3"].astype(jnp.bfloat16),
                     preferred_element_type=jnp.float32) + params["b3"]
        return jax.nn.log_softmax(lg, axis=1)

    # full-f32 reference (semantics check; bf16 operands -> loose tolerance)
    def ref_f32(x2d):
        h1 = jnp.maximum(x2d @ params["w1"] + params["b1"], 0.0)
        h2 = jnp.maximum(h1 @ params["w2"] + params["b2"], 0.0)
        lg = h2 @ params["w3"] + params["b3"]
        return jax.nn.log_softmax(lg, axis=1)

    assert jnp.allclose(out, ref_bf16(x2d), atol=2e-3, rtol=2e-3)
    assert jnp.allclose(out, ref_f32(x2d), atol=1e-1, rtol=1e-1)

    print("KERNEL_OK")
</pallas_src>

<mosaic_0001>
module attributes {stable_mosaic.version = 11 : i64} {
  func.func @_fc_kernel(%arg0: i32, %arg1: memref<16x1024xbf16, #tpu.memory_space<vmem>>, %arg2: memref<1024x384xbf16, #tpu.memory_space<vmem>>, %arg3: memref<1x384xf32, #tpu.memory_space<vmem>>, %arg4: memref<384x128xbf16, #tpu.memory_space<vmem>>, %arg5: memref<1x128xf32, #tpu.memory_space<vmem>>, %arg6: memref<128x128xbf16, #tpu.memory_space<vmem>>, %arg7: memref<1x128xf32, #tpu.memory_space<vmem>>, %arg8: memref<16x128xf32, #tpu.memory_space<vmem>>) attributes {dimension_semantics = [#tpu.dimension_semantics<parallel>], iteration_bounds = array<i64: 1>, scalar_prefetch = 0 : i64, scratch_operands = 0 : i64, tpu.core_type = #tpu.core_type<tc>, window_params = [{transform_indices = @transform_0, window_bounds = array<i64: 16, 1024>}, {pipeline_mode = #tpu.pipeline_mode<synchronous>, transform_indices = @transform_1, window_bounds = array<i64: 1024, 384>}, {pipeline_mode = #tpu.pipeline_mode<synchronous>, transform_indices = @transform_2, window_bounds = array<i64: 1, 384>}, {pipeline_mode = #tpu.pipeline_mode<synchronous>, transform_indices = @transform_3, window_bounds = array<i64: 384, 128>}, {pipeline_mode = #tpu.pipeline_mode<synchronous>, transform_indices = @transform_4, window_bounds = array<i64: 1, 128>}, {pipeline_mode = #tpu.pipeline_mode<synchronous>, transform_indices = @transform_5, window_bounds = array<i64: 128, 128>}, {pipeline_mode = #tpu.pipeline_mode<synchronous>, transform_indices = @transform_6, window_bounds = array<i64: 1, 128>}, {transform_indices = @transform_7, window_bounds = array<i64: 16, 128>}]} {
    %c0 = arith.constant 0 : index
    %c0_0 = arith.constant 0 : index
    %0 = vector.load %arg1[%c0, %c0_0] : memref<16x1024xbf16, #tpu.memory_space<vmem>>, vector<16x1024xbf16>
    %c0_1 = arith.constant 0 : index
    %c0_2 = arith.constant 0 : index
    %1 = vector.load %arg2[%c0_1, %c0_2] : memref<1024x384xbf16, #tpu.memory_space<vmem>>, vector<1024x384xbf16>
    %cst = arith.constant dense<0.000000e+00> : vector<16x384xf32>
    %2 = tpu.matmul %0, %1, %cst {dimension_numbers = #tpu.dot_dimension_numbers<[1], [0], [0], [1], [0, 0, 1, 1], [], []>} : vector<16x1024xbf16>, vector<1024x384xbf16>, vector<16x384xf32> -> vector<16x384xf32>
    %c0_3 = arith.constant 0 : index
    %c0_4 = arith.constant 0 : index
    %3 = vector.load %arg3[%c0_3, %c0_4] : memref<1x384xf32, #tpu.memory_space<vmem>>, vector<1x384xf32>
    %4 = vector.broadcast %3 : vector<1x384xf32> to vector<16x384xf32>
    %5 = arith.addf %2, %4 : vector<16x384xf32>
    %cst_5 = arith.constant 0.000000e+00 : f32
    %6 = vector.broadcast %cst_5 : f32 to vector<16x384xf32>
    %7 = arith.maximumf %5, %6 : vector<16x384xf32>
    %8 = arith.truncf %7 : vector<16x384xf32> to vector<16x384xbf16>
    %c0_6 = arith.constant 0 : index
    %c0_7 = arith.constant 0 : index
    %9 = vector.load %arg4[%c0_6, %c0_7] : memref<384x128xbf16, #tpu.memory_space<vmem>>, vector<384x128xbf16>
    %cst_8 = arith.constant dense<0.000000e+00> : vector<16x128xf32>
    %10 = tpu.matmul %8, %9, %cst_8 {dimension_numbers = #tpu.dot_dimension_numbers<[1], [0], [0], [1], [0, 0, 1, 1], [], []>} : vector<16x384xbf16>, vector<384x128xbf16>, vector<16x128xf32> -> vector<16x128xf32>
    %c0_9 = arith.constant 0 : index
    %c0_10 = arith.constant 0 : index
    %11 = vector.load %arg5[%c0_9, %c0_10] : memref<1x128xf32, #tpu.memory_space<vmem>>, vector<1x128xf32>
    %12 = vector.broadcast %11 : vector<1x128xf32> to vector<16x128xf32>
    %13 = arith.addf %10, %12 : vector<16x128xf32>
    %cst_11 = arith.constant 0.000000e+00 : f32
    %14 = vector.broadcast %cst_11 : f32 to vector<16x128xf32>
    %15 = arith.maximumf %13, %14 : vector<16x128xf32>
    %16 = arith.truncf %15 : vector<16x128xf32> to vector<16x128xbf16>
    %c0_12 = arith.constant 0 : index
    %c0_13 = arith.constant 0 : index
    %17 = vector.load %arg6[%c0_12, %c0_13] : memref<128x128xbf16, #tpu.memory_space<vmem>>, vector<128x128xbf16>
    %cst_14 = arith.constant dense<0.000000e+00> : vector<16x128xf32>
    %18 = tpu.matmul %16, %17, %cst_14 {dimension_numbers = #tpu.dot_dimension_numbers<[1], [0], [0], [1], [0, 0, 1, 1], [], []>} : vector<16x128xbf16>, vector<128x128xbf16>, vector<16x128xf32> -> vector<16x128xf32>
    %c0_15 = arith.constant 0 : index
    %c0_16 = arith.constant 0 : index
    %19 = vector.load %arg7[%c0_15, %c0_16] : memref<1x128xf32, #tpu.memory_space<vmem>>, vector<1x128xf32>
    %20 = vector.broadcast %19 : vector<1x128xf32> to vector<16x128xf32>
    %21 = arith.addf %18, %20 : vector<16x128xf32>
    %22 = tpu.iota {dimensions = array<i32: 1>} : vector<16x128xi32>
    %c10_i32 = arith.constant 10 : i32
    %23 = vector.broadcast %c10_i32 : i32 to vector<16x128xi32>
    %24 = arith.cmpi slt, %22, %23 : vector<16x128xi32>
    %cst_17 = arith.constant -1.000000e+30 : f32
    %25 = vector.broadcast %cst_17 : f32 to vector<16x128xf32>
    %26 = arith.select %24, %21, %25 : vector<16x128xi1>, vector<16x128xf32>
    %cst_18 = arith.constant dense<0xFF800000> : vector<16xf32>
    %27 = vector.multi_reduction <maximumf>, %26, %cst_18 [1] : vector<16x128xf32> to vector<16xf32>
    %28 = vector.shape_cast %27 : vector<16xf32> to vector<16x1xf32>
    %29 = vector.broadcast %28 : vector<16x1xf32> to vector<16x128xf32>
    %30 = arith.subf %26, %29 : vector<16x128xf32>
    %31 = math.exp %30 : vector<16x128xf32>
    %cst_19 = arith.constant dense<0.000000e+00> : vector<16xf32>
    %32 = vector.multi_reduction <add>, %31, %cst_19 [1] : vector<16x128xf32> to vector<16xf32>
    %33 = vector.shape_cast %32 : vector<16xf32> to vector<16x1xf32>
    %34 = math.log %33 : vector<16x1xf32>
    %35 = vector.broadcast %34 : vector<16x1xf32> to vector<16x128xf32>
    %36 = arith.subf %30, %35 : vector<16x128xf32>
    %c0_20 = arith.constant 0 : index
    %c0_21 = arith.constant 0 : index
    %37 = vector.load %arg8[%c0_20, %c0_21] : memref<16x128xf32, #tpu.memory_space<vmem>>, vector<16x128xf32>
    tpu.vector_store %arg8[%c0_20, %c0_21], %36 {strides = array<i32>} : memref<16x128xf32, #tpu.memory_space<vmem>>, vector<16x128xf32>,
    return
  }
  func.func @transform_0(%arg0: i32) -> (i32, i32) {
    %c0_i32 = arith.constant 0 : i32
    %c0_i32_0 = arith.constant 0 : i32
    return %arg0, %c0_i32 : i32, i32
  }
  func.func @transform_1(%arg0: i32) -> (i32, i32) {
    %c0_i32 = arith.constant 0 : i32
    %c0_i32_0 = arith.constant 0 : i32
    %c0_i32_1 = arith.constant 0 : i32
    return %c0_i32, %c0_i32_0 : i32, i32
  }
  func.func @transform_2(%arg0: i32) -> (i32, i32) {
    %c0_i32 = arith.constant 0 : i32
    %c0_i32_0 = arith.constant 0 : i32
    %c0_i32_1 = arith.constant 0 : i32
    return %c0_i32, %c0_i32_0 : i32, i32
  }
  func.func @transform_3(%arg0: i32) -> (i32, i32) {
    %c0_i32 = arith.constant 0 : i32
    %c0_i32_0 = arith.constant 0 : i32
    %c0_i32_1 = arith.constant 0 : i32
    return %c0_i32, %c0_i32_0 : i32, i32
  }
  func.func @transform_4(%arg0: i32) -> (i32, i32) {
    %c0_i32 = arith.constant 0 : i32
    %c0_i32_0 = arith.constant 0 : i32
    %c0_i32_1 = arith.constant 0 : i32
    return %c0_i32, %c0_i32_0 : i32, i32
  }
  func.func @transform_5(%arg0: i32) -> (i32, i32) {
    %c0_i32 = arith.constant 0 : i32
    %c0_i32_0 = arith.constant 0 : i32
    %c0_i32_1 = arith.constant 0 : i32
    return %c0_i32, %c0_i32_0 : i32, i32
  }
  func.func @transform_6(%arg0: i32) -> (i32, i32) {
    %c0_i32 = arith.constant 0 : i32
    %c0_i32_0 = arith.constant 0 : i32
    %c0_i32_1 = arith.constant 0 : i32
    return %c0_i32, %c0_i32_0 : i32, i32
  }
  func.func @transform_7(%arg0: i32) -> (i32, i32) {
    %c0_i32 = arith.constant 0 : i32
    %c0_i32_0 = arith.constant 0 : i32
    return %arg0, %c0_i32 : i32, i32
  }
}

</mosaic_0001>

<llo_original>
// kernel: fc_forward.1
$region0: #{fc_forward.1}
  #allocation0 [shape = 'u32[]', space=smem, size = 0x4, offset = 0x4, fixed_abs, tag = 'smem constant byte address 0x4 - core index']
  #allocation1 [shape = 'u32[72,128]{1,0:T(1,128)}', space=vmem, size = 0x9000, scoped, tag = 'internal scratch']
  %s0 = inlined_call_operand.vmem [shape: bf16[16,1024], index: 0, kind: input, shape index: {}]
  %s1 = inlined_call_operand.hbm [shape: bf16[1024,384], index: 1, kind: input, shape index: {}]
  %s2 = inlined_call_operand.vmem [shape: f32[1,384], index: 2, kind: input, shape index: {}]
  %s3 = inlined_call_operand.vmem [shape: bf16[384,128], index: 3, kind: input, shape index: {}]
  %s4 = inlined_call_operand.vmem [shape: f32[1,128], index: 4, kind: input, shape index: {}]
  %s5 = inlined_call_operand.vmem [shape: bf16[128,128], index: 5, kind: input, shape index: {}]
  %s6 = inlined_call_operand.vmem [shape: f32[1,128], index: 6, kind: input, shape index: {}]
  %s7 = inlined_call_operand.vmem [shape: f32[16,128], index: 7, kind: output, shape index: {}]
  %s8 = sld [smem:[#allocation0]]
  $region42: #{fc_forward.1} parent=0
    _
  %s10 = ssub.s32 1, %s8
  %s11 = scalar_select 0, %s10, %s8
  $region1: #{fc_forward.1} parent=0
    #allocation2 [shape = 'u8[786432]{0}', space=vmem, size = 0xc0000, scoped, tag = 'input window, operand 1, single buffered']
    #allocation3 [shape = 's32[1]{0}', space=sflag, size = 0x4, scoped, tag = 'scoped memory for fc_forward.1']
    %12 = vsyncpa [#allocation3], 0
    // Predicated region
    $region2: #{fc_forward.1} parent=1 // pred_check
      _
    $region3: #{fc_forward.1} parent=1 // pred_check_branch
      %14 = sbr.rel (0) target = $region5
    $region4: #{fc_forward.1} parent=1 // pred_region
      _
    $region5: #{fc_forward.1} parent=1 // pred_fallthru
      _
    // Predicated region
    $region6: #{fc_forward.1} parent=1 // pred_check
      _
    $region7: #{fc_forward.1} parent=1 // pred_check_branch
      %16 = sbr.rel (0) target = $region9
    $region8: #{fc_forward.1} parent=1 // pred_region
      %18 = vsyncadd [#allocation3], 0
      %s19 = sshll.u32 %s1, 4
      %s20 = int_to_ptr.hbm [resolvable:$true] %s19
      %s21 = sshll.u32 [#allocation2], 4
      %s22 = int_to_ptr.vmem [resolvable:$true] %s21
      %27 = dma.hbm_to_vmem [thread:$0]  %s20, 24576, %s22, [#allocation3], 192, 192, 12
    $region9: #{fc_forward.1} parent=1 // pred_fallthru
      _
    // Predicated region
    $region10: #{fc_forward.1} parent=1 // pred_check
      _
    $region11: #{fc_forward.1} parent=1 // pred_check_branch
      %29 = sbr.rel (0) target = $region13
    $region12: #{fc_forward.1} parent=1 // pred_region
      _
    $region13: #{fc_forward.1} parent=1 // pred_fallthru
      _
    // Predicated region
    $region14: #{fc_forward.1} parent=1 // pred_check
      _
    $region15: #{fc_forward.1} parent=1 // pred_check_branch
      %31 = sbr.rel (0) target = $region17
    $region16: #{fc_forward.1} parent=1 // pred_region
      _
    $region17: #{fc_forward.1} parent=1 // pred_fallthru
      _
    // Predicated region
    $region18: #{fc_forward.1} parent=1 // pred_check
      _
    $region19: #{fc_forward.1} parent=1 // pred_check_branch
      %33 = sbr.rel (0) target = $region21
    $region20: #{fc_forward.1} parent=1 // pred_region
      _
    $region21: #{fc_forward.1} parent=1 // pred_fallthru
      _
    // Predicated region
    $region22: #{fc_forward.1} parent=1 // pred_check
      _
    $region23: #{fc_forward.1} parent=1 // pred_check_branch
      %35 = sbr.rel (0) target = $region25
    $region24: #{fc_forward.1} parent=1 // pred_region
      _
    $region25: #{fc_forward.1} parent=1 // pred_fallthru
      _
    // Predicated region
    $region26: #{fc_forward.1} parent=1 // pred_check
      _
    $region27: #{fc_forward.1} parent=1 // pred_check_branch
      %37 = sbr.rel (0) target = $region29
    $region28: #{fc_forward.1} parent=1 // pred_region
      _
    $region29: #{fc_forward.1} parent=1 // pred_fallthru
      _
    // Predicated region
    $region30: #{fc_forward.1} parent=1 // pred_check
      _
    $region31: #{fc_forward.1} parent=1 // pred_check_branch
      %39 = sbr.rel (0) target = $region33
    $region32: #{fc_forward.1} parent=1 // pred_region
      %41 = dma.done [#allocation3], 24576
    $region33: #{fc_forward.1} parent=1 // pred_fallthru
      _
    %v42 = vld [vmem:[%s0] sm:$0xff]
    %v43 = vld [vmem:[%s0 + $0x8] sm:$0xff]
    %v44 = vld [vmem:[%s0 + $0x10] sm:$0xff]
    %v45 = vld [vmem:[%s0 + $0x18] sm:$0xff]
    %v46 = vld [vmem:[%s0 + $0x20] sm:$0xff]
    %v47 = vld [vmem:[%s0 + $0x28] sm:$0xff]
    %v48 = vld [vmem:[%s0 + $0x30] sm:$0xff]
    %v49 = vld [vmem:[%s0 + $0x38] sm:$0xff]
    %v50 = vld [vmem:[#allocation2] sm:$0xff]
    %v51 = vld [vmem:[#allocation2 + $0x8] sm:$0xf]
    %v52 = vld [vmem:[#allocation2 + $0xc] sm:$0xff]
    %v53 = vld [vmem:[#allocation2 + $0x14] sm:$0xf]
    %v54 = vld [vmem:[#allocation2 + $0x18] sm:$0xff]
    %v55 = vld [vmem:[#allocation2 + $0x20] sm:$0xf]
    %v56 = vld [vmem:[#allocation2 + $0x24] sm:$0xff]
    %v57 = vld [vmem:[#allocation2 + $0x2c] sm:$0xf]
    %v58 = vld [vmem:[#allocation2 + $0x30] sm:$0xff]
    %v59 = vld [vmem:[#allocation2 + $0x38] sm:$0xf]
    %v60 = vld [vmem:[#allocation2 + $0x3c] sm:$0xff]
    %v61 = vld [vmem:[#allocation2 + $0x44] sm:$0xf]
    %v62 = vld [vmem:[#allocation2 + $0x48] sm:$0xff]
    %v63 = vld [vmem:[#allocation2 + $0x50] sm:$0xf]
    %v64 = vld [vmem:[#allocation2 + $0x54] sm:$0xff]
    %v65 = vld [vmem:[#allocation2 + $0x5c] sm:$0xf]
    %v66 = vld [vmem:[#allocation2 + $0x60] sm:$0xff]
    %v67 = vld [vmem:[#allocation2 + $0x68] sm:$0xf]
    %v68 = vld [vmem:[#allocation2 + $0x6c] sm:$0xff]
    %v69 = vld [vmem:[#allocation2 + $0x74] sm:$0xf]
    %v70 = vld [vmem:[#allocation2 + $0x78] sm:$0xff]
    %v71 = vld [vmem:[#allocation2 + $0x80] sm:$0xf]
    %v72 = vld [vmem:[#allocation2 + $0x84] sm:$0xff]
    %v73 = vld [vmem:[#allocation2 + $0x8c] sm:$0xf]
    %v74 = vld [vmem:[#allocation2 + $0x90] sm:$0xff]
    %v75 = vld [vmem:[#allocation2 + $0x98] sm:$0xf]
    %v76 = vld [vmem:[#allocation2 + $0x9c] sm:$0xff]
    %v77 = vld [vmem:[#allocation2 + $0xa4] sm:$0xf]
    %v78 = vld [vmem:[#allocation2 + $0xa8] sm:$0xff]
    %v79 = vld [vmem:[#allocation2 + $0xb0] sm:$0xf]
    %v80 = vld [vmem:[#allocation2 + $0xb4] sm:$0xff]
    %v81 = vld [vmem:[#allocation2 + $0xbc] sm:$0xf]
    %v82 = vld [vmem:[#allocation2 + $0xc0] sm:$0xff]
    %v83 = vld [vmem:[#allocation2 + $0xc8] sm:$0xf]
    %v84 = vld [vmem:[#allocation2 + $0xcc] sm:$0xff]
    %v85 = vld [vmem:[#allocation2 + $0xd4] sm:$0xf]
    %v86 = vld [vmem:[#allocation2 + $0xd8] sm:$0xff]
    %v87 = vld [vmem:[#allocation2 + $0xe0] sm:$0xf]
    %v88 = vld [vmem:[#allocation2 + $0xe4] sm:$0xff]
    %v89 = vld [vmem:[#allocation2 + $0xec] sm:$0xf]
    %v90 = vld [vmem:[#allocation2 + $0xf0] sm:$0xff]
    %v91 = vld [vmem:[#allocation2 + $0xf8] sm:$0xf]
    %v92 = vld [vmem:[#allocation2 + $0xfc] sm:$0xff]
    %v93 = vld [vmem:[#allocation2 + $0x104] sm:$0xf]
    %v94 = vld [vmem:[#allocation2 + $0x108] sm:$0xff]
    %v95 = vld [vmem:[#allocation2 + $0x110] sm:$0xf]
    %v96 = vld [vmem:[#allocation2 + $0x114] sm:$0xff]
    %v97 = vld [vmem:[#allocation2 + $0x11c] sm:$0xf]
    %v98 = vld [vmem:[#allocation2 + $0x120] sm:$0xff]
    %v99 = vld [vmem:[#allocation2 + $0x128] sm:$0xf]
    %v100 = vld [vmem:[#allocation2 + $0x12c] sm:$0xff]
    %v101 = vld [vmem:[#allocation2 + $0x134] sm:$0xf]
    %v102 = vld [vmem:[#allocation2 + $0x138] sm:$0xff]
    %v103 = vld [vmem:[#allocation2 + $0x140] sm:$0xf]
    %v104 = vld [vmem:[#allocation2 + $0x144] sm:$0xff]
    %v105 = vld [vmem:[#allocation2 + $0x14c] sm:$0xf]
    %v106 = vld [vmem:[#allocation2 + $0x150] sm:$0xff]
    %v107 = vld [vmem:[#allocation2 + $0x158] sm:$0xf]
    %v108 = vld [vmem:[#allocation2 + $0x15c] sm:$0xff]
    %v109 = vld [vmem:[#allocation2 + $0x164] sm:$0xf]
    %v110 = vld [vmem:[#allocation2 + $0x168] sm:$0xff]
    %v111 = vld [vmem:[#allocation2 + $0x170] sm:$0xf]
    %v112 = vld [vmem:[#allocation2 + $0x174] sm:$0xff]
    %v113 = vld [vmem:[#allocation2 + $0x17c] sm:$0xf]
    %v114 = vld [vmem:[#allocation2 + $0x180] sm:$0xff]
    %v115 = vld [vmem:[#allocation2 + $0x188] sm:$0xf]
    %v116 = vld [vmem:[#allocation2 + $0x18c] sm:$0xff]
    %v117 = vld [vmem:[#allocation2 + $0x194] sm:$0xf]
    %v118 = vld [vmem:[#allocation2 + $0x198] sm:$0xff]
    %v119 = vld [vmem:[#allocation2 + $0x1a0] sm:$0xf]
    %v120 = vld [vmem:[#allocation2 + $0x1a4] sm:$0xff]
    %v121 = vld [vmem:[#allocation2 + $0x1ac] sm:$0xf]
    %v122 = vld [vmem:[#allocation2 + $0x1b0] sm:$0xff]
    %v123 = vld [vmem:[#allocation2 + $0x1b8] sm:$0xf]
    %v124 = vld [vmem:[#allocation2 + $0x1bc] sm:$0xff]
    %v125 = vld [vmem:[#allocation2 + $0x1c4] sm:$0xf]
    %v126 = vld [vmem:[#allocation2 + $0x1c8] sm:$0xff]
    %v127 = vld [vmem:[#allocation2 + $0x1d0] sm:$0xf]
    %v128 = vld [vmem:[#allocation2 + $0x1d4] sm:$0xff]
    %v129 = vld [vmem:[#allocation2 + $0x1dc] sm:$0xf]
    %v130 = vld [vmem:[#allocation2 + $0x1e0] sm:$0xff]
    %v131 = vld [vmem:[#allocation2 + $0x1e8] sm:$0xf]
    %v132 = vld [vmem:[#allocation2 + $0x1ec] sm:$0xff]
    %v133 = vld [vmem:[#allocation2 + $0x1f4] sm:$0xf]
    %v134 = vld [vmem:[#allocation2 + $0x1f8] sm:$0xff]
    %v135 = vld [vmem:[#allocation2 + $0x200] sm:$0xf]
    %v136 = vld [vmem:[#allocation2 + $0x204] sm:$0xff]
    %v137 = vld [vmem:[#allocation2 + $0x20c] sm:$0xf]
    %v138 = vld [vmem:[#allocation2 + $0x210] sm:$0xff]
    %v139 = vld [vmem:[#allocation2 + $0x218] sm:$0xf]
    %v140 = vld [vmem:[#allocation2 + $0x21c] sm:$0xff]
    %v141 = vld [vmem:[#allocation2 + $0x224] sm:$0xf]
    %v142 = vld [vmem:[#allocation2 + $0x228] sm:$0xff]
    %v143 = vld [vmem:[#allocation2 + $0x230] sm:$0xf]
    %v144 = vld [vmem:[#allocation2 + $0x234] sm:$0xff]
    %v145 = vld [vmem:[#allocation2 + $0x23c] sm:$0xf]
    %v146 = vld [vmem:[#allocation2 + $0x240] sm:$0xff]
    %v147 = vld [vmem:[#allocation2 + $0x248] sm:$0xf]
    %v148 = vld [vmem:[#allocation2 + $0x24c] sm:$0xff]
    %v149 = vld [vmem:[#allocation2 + $0x254] sm:$0xf]
    %v150 = vld [vmem:[#allocation2 + $0x258] sm:$0xff]
    %v151 = vld [vmem:[#allocation2 + $0x260] sm:$0xf]
    %v152 = vld [vmem:[#allocation2 + $0x264] sm:$0xff]
    %v153 = vld [vmem:[#allocation2 + $0x26c] sm:$0xf]
    %v154 = vld [vmem:[#allocation2 + $0x270] sm:$0xff]
    %v155 = vld [vmem:[#allocation2 + $0x278] sm:$0xf]
    %v156 = vld [vmem:[#allocation2 + $0x27c] sm:$0xff]
    %v157 = vld [vmem:[#allocation2 + $0x284] sm:$0xf]
    %v158 = vld [vmem:[#allocation2 + $0x288] sm:$0xff]
    %v159 = vld [vmem:[#allocation2 + $0x290] sm:$0xf]
    %v160 = vld [vmem:[#allocation2 + $0x294] sm:$0xff]
    %v161 = vld [vmem:[#allocation2 + $0x29c] sm:$0xf]
    %v162 = vld [vmem:[#allocation2 + $0x2a0] sm:$0xff]
    %v163 = vld [vmem:[#allocation2 + $0x2a8] sm:$0xf]
    %v164 = vld [vmem:[#allocation2 + $0x2ac] sm:$0xff]
    %v165 = vld [vmem:[#allocation2 + $0x2b4] sm:$0xf]
    %v166 = vld [vmem:[#allocation2 + $0x2b8] sm:$0xff]
    %v167 = vld [vmem:[#allocation2 + $0x2c0] sm:$0xf]
    %v168 = vld [vmem:[#allocation2 + $0x2c4] sm:$0xff]
    %v169 = vld [vmem:[#allocation2 + $0x2cc] sm:$0xf]
    %v170 = vld [vmem:[#allocation2 + $0x2d0] sm:$0xff]
    %v171 = vld [vmem:[#allocation2 + $0x2d8] sm:$0xf]
    %v172 = vld [vmem:[#allocation2 + $0x2dc] sm:$0xff]
    %v173 = vld [vmem:[#allocation2 + $0x2e4] sm:$0xf]
    %v174 = vld [vmem:[#allocation2 + $0x2e8] sm:$0xff]
    %v175 = vld [vmem:[#allocation2 + $0x2f0] sm:$0xf]
    %v176 = vld [vmem:[#allocation2 + $0x2f4] sm:$0xff]
    %v177 = vld [vmem:[#allocation2 + $0x2fc] sm:$0xf]
    %v178 = vld [vmem:[#allocation2 + $0x300] sm:$0xff]
    %v179 = vld [vmem:[#allocation2 + $0x308] sm:$0xf]
    %v180 = vld [vmem:[#allocation2 + $0x30c] sm:$0xff]
    %v181 = vld [vmem:[#allocation2 + $0x314] sm:$0xf]
    %v182 = vld [vmem:[#allocation2 + $0x318] sm:$0xff]
    %v183 = vld [vmem:[#allocation2 + $0x320] sm:$0xf]
    %v184 = vld [vmem:[#allocation2 + $0x324] sm:$0xff]
    %v185 = vld [vmem:[#allocation2 + $0x32c] sm:$0xf]
    %v186 = vld [vmem:[#allocation2 + $0x330] sm:$0xff]
    %v187 = vld [vmem:[#allocation2 + $0x338] sm:$0xf]
    %v188 = vld [vmem:[#allocation2 + $0x33c] sm:$0xff]
    %v189 = vld [vmem:[#allocation2 + $0x344] sm:$0xf]
    %v190 = vld [vmem:[#allocation2 + $0x348] sm:$0xff]
    %v191 = vld [vmem:[#allocation2 + $0x350] sm:$0xf]
    %v192 = vld [vmem:[#allocation2 + $0x354] sm:$0xff]
    %v193 = vld [vmem:[#allocation2 + $0x35c] sm:$0xf]
    %v194 = vld [vmem:[#allocation2 + $0x360] sm:$0xff]
    %v195 = vld [vmem:[#allocation2 + $0x368] sm:$0xf]
    %v196 = vld [vmem:[#allocation2 + $0x36c] sm:$0xff]
    %v197 = vld [vmem:[#allocation2 + $0x374] sm:$0xf]
    %v198 = vld [vmem:[#allocation2 + $0x378] sm:$0xff]
    %v199 = vld [vmem:[#allocation2 + $0x380] sm:$0xf]
    %v200 = vld [vmem:[#allocation2 + $0x384] sm:$0xff]
    %v201 = vld [vmem:[#allocation2 + $0x38c] sm:$0xf]
    %v202 = vld [vmem:[#allocation2 + $0x390] sm:$0xff]
    %v203 = vld [vmem:[#allocation2 + $0x398] sm:$0xf]
    %v204 = vld [vmem:[#allocation2 + $0x39c] sm:$0xff]
    %v205 = vld [vmem:[#allocation2 + $0x3a4] sm:$0xf]
    %v206 = vld [vmem:[#allocation2 + $0x3a8] sm:$0xff]
    %v207 = vld [vmem:[#allocation2 + $0x3b0] sm:$0xf]
    %v208 = vld [vmem:[#allocation2 + $0x3b4] sm:$0xff]
    %v209 = vld [vmem:[#allocation2 + $0x3bc] sm:$0xf]
    %v210 = vld [vmem:[#allocation2 + $0x3c0] sm:$0xff]
    %v211 = vld [vmem:[#allocation2 + $0x3c8] sm:$0xf]
    %v212 = vld [vmem:[#allocation2 + $0x3cc] sm:$0xff]
    %v213 = vld [vmem:[#allocation2 + $0x3d4] sm:$0xf]
    %v214 = vld [vmem:[#allocation2 + $0x3d8] sm:$0xff]
    %v215 = vld [vmem:[#allocation2 + $0x3e0] sm:$0xf]
    %v216 = vld [vmem:[#allocation2 + $0x3e4] sm:$0xff]
    %v217 = vld [vmem:[#allocation2 + $0x3ec] sm:$0xf]
    %v218 = vld [vmem:[#allocation2 + $0x3f0] sm:$0xff]
    %v219 = vld [vmem:[#allocation2 + $0x3f8] sm:$0xf]
    %v220 = vld [vmem:[#allocation2 + $0x3fc] sm:$0xff]
    %v221 = vld [vmem:[#allocation2 + $0x404] sm:$0xf]
    %v222 = vld [vmem:[#allocation2 + $0x408] sm:$0xff]
    %v223 = vld [vmem:[#allocation2 + $0x410] sm:$0xf]
    %v224 = vld [vmem:[#allocation2 + $0x414] sm:$0xff]
    %v225 = vld [vmem:[#allocation2 + $0x41c] sm:$0xf]
    %v226 = vld [vmem:[#allocation2 + $0x420] sm:$0xff]
    %v227 = vld [vmem:[#allocation2 + $0x428] sm:$0xf]
    %v228 = vld [vmem:[#allocation2 + $0x42c] sm:$0xff]
    %v229 = vld [vmem:[#allocation2 + $0x434] sm:$0xf]
    %v230 = vld [vmem:[#allocation2 + $0x438] sm:$0xff]
    %v231 = vld [vmem:[#allocation2 + $0x440] sm:$0xf]
    %v232 = vld [vmem:[#allocation2 + $0x444] sm:$0xff]
    %v233 = vld [vmem:[#allocation2 + $0x44c] sm:$0xf]
    %v234 = vld [vmem:[#allocation2 + $0x450] sm:$0xff]
    %v235 = vld [vmem:[#allocation2 + $0x458] sm:$0xf]
    %v236 = vld [vmem:[#allocation2 + $0x45c] sm:$0xff]
    %v237 = vld [vmem:[#allocation2 + $0x464] sm:$0xf]
    %v238 = vld [vmem:[#allocation2 + $0x468] sm:$0xff]
    %v239 = vld [vmem:[#allocation2 + $0x470] sm:$0xf]
    %v240 = vld [vmem:[#allocation2 + $0x474] sm:$0xff]
    %v241 = vld [vmem:[#allocation2 + $0x47c] sm:$0xf]
    %v242 = vld [vmem:[#allocation2 + $0x480] sm:$0xff]
    %v243 = vld [vmem:[#allocation2 + $0x488] sm:$0xf]
    %v244 = vld [vmem:[#allocation2 + $0x48c] sm:$0xff]
    %v245 = vld [vmem:[#allocation2 + $0x494] sm:$0xf]
    %v246 = vld [vmem:[#allocation2 + $0x498] sm:$0xff]
    %v247 = vld [vmem:[#allocation2 + $0x4a0] sm:$0xf]
    %v248 = vld [vmem:[#allocation2 + $0x4a4] sm:$0xff]
    %v249 = vld [vmem:[#allocation2 + $0x4ac] sm:$0xf]
    %v250 = vld [vmem:[#allocation2 + $0x4b0] sm:$0xff]
    %v251 = vld [vmem:[#allocation2 + $0x4b8] sm:$0xf]
    %v252 = vld [vmem:[#allocation2 + $0x4bc] sm:$0xff]
    %v253 = vld [vmem:[#allocation2 + $0x4c4] sm:$0xf]
    %v254 = vld [vmem:[#allocation2 + $0x4c8] sm:$0xff]
    %v255 = vld [vmem:[#allocation2 + $0x4d0] sm:$0xf]
    %v256 = vld [vmem:[#allocation2 + $0x4d4] sm:$0xff]
    %v257 = vld [vmem:[#allocation2 + $0x4dc] sm:$0xf]
    %v258 = vld [vmem:[#allocation2 + $0x4e0] sm:$0xff]
    %v259 = vld [vmem:[#allocation2 + $0x4e8] sm:$0xf]
    %v260 = vld [vmem:[#allocation2 + $0x4ec] sm:$0xff]
    %v261 = vld [vmem:[#allocation2 + $0x4f4] sm:$0xf]
    %v262 = vld [vmem:[#allocation2 + $0x4f8] sm:$0xff]
    %v263 = vld [vmem:[#allocation2 + $0x500] sm:$0xf]
    %v264 = vld [vmem:[#allocation2 + $0x504] sm:$0xff]
    %v265 = vld [vmem:[#allocation2 + $0x50c] sm:$0xf]
    %v266 = vld [vmem:[#allocation2 + $0x510] sm:$0xff]
    %v267 = vld [vmem:[#allocation2 + $0x518] sm:$0xf]
    %v268 = vld [vmem:[#allocation2 + $0x51c] sm:$0xff]
    %v269 = vld [vmem:[#allocation2 + $0x524] sm:$0xf]
    %v270 = vld [vmem:[#allocation2 + $0x528] sm:$0xff]
    %v271 = vld [vmem:[#allocation2 + $0x530] sm:$0xf]
    %v272 = vld [vmem:[#allocation2 + $0x534] sm:$0xff]
    %v273 = vld [vmem:[#allocation2 + $0x53c] sm:$0xf]
    %v274 = vld [vmem:[#allocation2 + $0x540] sm:$0xff]
    %v275 = vld [vmem:[#allocation2 + $0x548] sm:$0xf]
    %v276 = vld [vmem:[#allocation2 + $0x54c] sm:$0xff]
    %v277 = vld [vmem:[#allocation2 + $0x554] sm:$0xf]
    %v278 = vld [vmem:[#allocation2 + $0x558] sm:$0xff]
    %v279 = vld [vmem:[#allocation2 + $0x560] sm:$0xf]
    %v280 = vld [vmem:[#allocation2 + $0x564] sm:$0xff]
    %v281 = vld [vmem:[#allocation2 + $0x56c] sm:$0xf]
    %v282 = vld [vmem:[#allocation2 + $0x570] sm:$0xff]
    %v283 = vld [vmem:[#allocation2 + $0x578] sm:$0xf]
    %v284 = vld [vmem:[#allocation2 + $0x57c] sm:$0xff]
    %v285 = vld [vmem:[#allocation2 + $0x584] sm:$0xf]
    %v286 = vld [vmem:[#allocation2 + $0x588] sm:$0xff]
    %v287 = vld [vmem:[#allocation2 + $0x590] sm:$0xf]
    %v288 = vld [vmem:[#allocation2 + $0x594] sm:$0xff]
    %v289 = vld [vmem:[#allocation2 + $0x59c] sm:$0xf]
    %v290 = vld [vmem:[#allocation2 + $0x5a0] sm:$0xff]
    %v291 = vld [vmem:[#allocation2 + $0x5a8] sm:$0xf]
    %v292 = vld [vmem:[#allocation2 + $0x5ac] sm:$0xff]
    %v293 = vld [vmem:[#allocation2 + $0x5b4] sm:$0xf]
    %v294 = vld [vmem:[#allocation2 + $0x5b8] sm:$0xff]
    %v295 = vld [vmem:[#allocation2 + $0x5c0] sm:$0xf]
    %v296 = vld [vmem:[#allocation2 + $0x5c4] sm:$0xff]
    %v297 = vld [vmem:[#allocation2 + $0x5cc] sm:$0xf]
    %v298 = vld [vmem:[#allocation2 + $0x5d0] sm:$0xff]
    %v299 = vld [vmem:[#allocation2 + $0x5d8] sm:$0xf]
    %v300 = vld [vmem:[#allocation2 + $0x5dc] sm:$0xff]
    %v301 = vld [vmem:[#allocation2 + $0x5e4] sm:$0xf]
    %v302 = vld [vmem:[#allocation2 + $0x5e8] sm:$0xff]
    %v303 = vld [vmem:[#allocation2 + $0x5f0] sm:$0xf]
    %v304 = vld [vmem:[#allocation2 + $0x5f4] sm:$0xff]
    %v305 = vld [vmem:[#allocation2 + $0x5fc] sm:$0xf]
    %v306 = vld [vmem:[%s2] sm:$0x7]
    %v308 = vperm.slane %v306, 0
    %v309 = vperm.slane %v306, 1
    %v310 = vperm.slane %v306, 2
    %v322 = vunpack.c.l.b16 %v42
    %v323 = vunpack.c.h.b16 %v42
    %v324 = vunpack.c.l.b16 %v43
    %v325 = vunpack.c.h.b16 %v43
    %v326 = vunpack.c.l.b16 %v44
    %v327 = vunpack.c.h.b16 %v44
    %v328 = vunpack.c.l.b16 %v45
    %v329 = vunpack.c.h.b16 %v45
    %v330 = vunpack.c.l.b16 %v46
    %v331 = vunpack.c.h.b16 %v46
    %v332 = vunpack.c.l.b16 %v47
    %v333 = vunpack.c.h.b16 %v47
    %v334 = vunpack.c.l.b16 %v48
    %v335 = vunpack.c.h.b16 %v48
    %v336 = vunpack.c.l.b16 %v49
    %v337 = vunpack.c.h.b16 %v49
    %v338 = vpack.c.b16 %v330, %v322
    %v339 = vpack.c.b16 %v331, %v323
    %v340 = vpack.c.b16 %v332, %v324
    %v341 = vpack.c.b16 %v333, %v325
    %v342 = vpack.c.b16 %v334, %v326
    %v343 = vpack.c.b16 %v335, %v327
    %v344 = vpack.c.b16 %v336, %v328
    %v345 = vpack.c.b16 %v337, %v329
    %v610 = vunpack.c.l.b16 %v50
    %v611 = vunpack.c.h.b16 %v50
    %v612 = vunpack.c.l.b16 %v51
    %v613 = vunpack.c.l.b16 %v52
    %v614 = vunpack.c.h.b16 %v52
    %v615 = vunpack.c.l.b16 %v53
    %v616 = vunpack.c.l.b16 %v54
    %v617 = vunpack.c.h.b16 %v54
    %v618 = vunpack.c.l.b16 %v55
    %v619 = vunpack.c.l.b16 %v56
    %v620 = vunpack.c.h.b16 %v56
    %v621 = vunpack.c.l.b16 %v57
    %v622 = vunpack.c.l.b16 %v58
    %v623 = vunpack.c.h.b16 %v58
    %v624 = vunpack.c.l.b16 %v59
    %v625 = vunpack.c.l.b16 %v60
    %v626 = vunpack.c.h.b16 %v60
    %v627 = vunpack.c.l.b16 %v61
    %v628 = vunpack.c.l.b16 %v62
    %v629 = vunpack.c.h.b16 %v62
    %v630 = vunpack.c.l.b16 %v63
    %v631 = vunpack.c.l.b16 %v64
    %v632 = vunpack.c.h.b16 %v64
    %v633 = vunpack.c.l.b16 %v65
    %v634 = vunpack.c.l.b16 %v66
    %v635 = vunpack.c.h.b16 %v66
    %v636 = vunpack.c.l.b16 %v67
    %v637 = vunpack.c.l.b16 %v68
    %v638 = vunpack.c.h.b16 %v68
    %v639 = vunpack.c.l.b16 %v69
    %v640 = vunpack.c.l.b16 %v70
    %v641 = vunpack.c.h.b16 %v70
    %v642 = vunpack.c.l.b16 %v71
    %v643 = vunpack.c.l.b16 %v72
    %v644 = vunpack.c.h.b16 %v72
    %v645 = vunpack.c.l.b16 %v73
    %v646 = vunpack.c.l.b16 %v74
    %v647 = vunpack.c.h.b16 %v74
    %v648 = vunpack.c.l.b16 %v75
    %v649 = vunpack.c.l.b16 %v76
    %v650 = vunpack.c.h.b16 %v76
    %v651 = vunpack.c.l.b16 %v77
    %v652 = vunpack.c.l.b16 %v78
    %v653 = vunpack.c.h.b16 %v78
    %v654 = vunpack.c.l.b16 %v79
    %v655 = vunpack.c.l.b16 %v80
    %v656 = vunpack.c.h.b16 %v80
    %v657 = vunpack.c.l.b16 %v81
    %v658 = vunpack.c.l.b16 %v82
    %v659 = vunpack.c.h.b16 %v82
    %v660 = vunpack.c.l.b16 %v83
    %v661 = vunpack.c.l.b16 %v84
    %v662 = vunpack.c.h.b16 %v84
    %v663 = vunpack.c.l.b16 %v85
    %v664 = vunpack.c.l.b16 %v86
    %v665 = vunpack.c.h.b16 %v86
    %v666 = vunpack.c.l.b16 %v87
    %v667 = vunpack.c.l.b16 %v88
    %v668 = vunpack.c.h.b16 %v88
    %v669 = vunpack.c.l.b16 %v89
    %v670 = vunpack.c.l.b16 %v90
    %v671 = vunpack.c.h.b16 %v90
    %v672 = vunpack.c.l.b16 %v91
    %v673 = vunpack.c.l.b16 %v92
    %v674 = vunpack.c.h.b16 %v92
    %v675 = vunpack.c.l.b16 %v93
    %v676 = vunpack.c.l.b16 %v94
    %v677 = vunpack.c.h.b16 %v94
    %v678 = vunpack.c.l.b16 %v95
    %v679 = vunpack.c.l.b16 %v96
    %v680 = vunpack.c.h.b16 %v96
    %v681 = vunpack.c.l.b16 %v97
    %v682 = vunpack.c.l.b16 %v98
    %v683 = vunpack.c.h.b16 %v98
    %v684 = vunpack.c.l.b16 %v99
    %v685 = vunpack.c.l.b16 %v100
    %v686 = vunpack.c.h.b16 %v100
    %v687 = vunpack.c.l.b16 %v101
    %v688 = vunpack.c.l.b16 %v102
    %v689 = vunpack.c.h.b16 %v102
    %v690 = vunpack.c.l.b16 %v103
    %v691 = vunpack.c.l.b16 %v104
    %v692 = vunpack.c.h.b16 %v104
    %v693 = vunpack.c.l.b16 %v105
    %v694 = vunpack.c.l.b16 %v106
    %v695 = vunpack.c.h.b16 %v106
    %v696 = vunpack.c.l.b16 %v107
    %v697 = vunpack.c.l.b16 %v108
    %v698 = vunpack.c.h.b16 %v108
    %v699 = vunpack.c.l.b16 %v109
    %v700 = vunpack.c.l.b16 %v110
    %v701 = vunpack.c.h.b16 %v110
    %v702 = vunpack.c.l.b16 %v111
    %v703 = vunpack.c.l.b16 %v112
    %v704 = vunpack.c.h.b16 %v112
    %v705 = vunpack.c.l.b16 %v113
    %v706 = vunpack.c.l.b16 %v114
    %v707 = vunpack.c.h.b16 %v114
    %v708 = vunpack.c.l.b16 %v115
    %v709 = vunpack.c.l.b16 %v116
    %v710 = vunpack.c.h.b16 %v116
    %v711 = vunpack.c.l.b16 %v117
    %v712 = vunpack.c.l.b16 %v118
    %v713 = vunpack.c.h.b16 %v118
    %v714 = vunpack.c.l.b16 %v119
    %v715 = vunpack.c.l.b16 %v120
    %v716 = vunpack.c.h.b16 %v120
    %v717 = vunpack.c.l.b16 %v121
    %v718 = vunpack.c.l.b16 %v122
    %v719 = vunpack.c.h.b16 %v122
    %v720 = vunpack.c.l.b16 %v123
    %v721 = vunpack.c.l.b16 %v124
    %v722 = vunpack.c.h.b16 %v124
    %v723 = vunpack.c.l.b16 %v125
    %v724 = vunpack.c.l.b16 %v126
    %v725 = vunpack.c.h.b16 %v126
    %v726 = vunpack.c.l.b16 %v127
    %v727 = vunpack.c.l.b16 %v128
    %v728 = vunpack.c.h.b16 %v128
    %v729 = vunpack.c.l.b16 %v129
    %v730 = vunpack.c.l.b16 %v130
    %v731 = vunpack.c.h.b16 %v130
    %v732 = vunpack.c.l.b16 %v131
    %v733 = vunpack.c.l.b16 %v132
    %v734 = vunpack.c.h.b16 %v132
    %v735 = vunpack.c.l.b16 %v133
    %v736 = vunpack.c.l.b16 %v134
    %v737 = vunpack.c.h.b16 %v134
    %v738 = vunpack.c.l.b16 %v135
    %v739 = vunpack.c.l.b16 %v136
    %v740 = vunpack.c.h.b16 %v136
    %v741 = vunpack.c.l.b16 %v137
    %v742 = vunpack.c.l.b16 %v138
    %v743 = vunpack.c.h.b16 %v138
    %v744 = vunpack.c.l.b16 %v139
    %v745 = vunpack.c.l.b16 %v140
    %v746 = vunpack.c.h.b16 %v140
    %v747 = vunpack.c.l.b16 %v141
    %v748 = vunpack.c.l.b16 %v142
    %v749 = vunpack.c.h.b16 %v142
    %v750 = vunpack.c.l.b16 %v143
    %v751 = vunpack.c.l.b16 %v144
    %v752 = vunpack.c.h.b16 %v144
    %v753 = vunpack.c.l.b16 %v145
    %v754 = vunpack.c.l.b16 %v146
    %v755 = vunpack.c.h.b16 %v146
    %v756 = vunpack.c.l.b16 %v147
    %v757 = vunpack.c.l.b16 %v148
    %v758 = vunpack.c.h.b16 %v148
    %v759 = vunpack.c.l.b16 %v149
    %v760 = vunpack.c.l.b16 %v150
    %v761 = vunpack.c.h.b16 %v150
    %v762 = vunpack.c.l.b16 %v151
    %v763 = vunpack.c.l.b16 %v152
    %v764 = vunpack.c.h.b16 %v152
    %v765 = vunpack.c.l.b16 %v153
    %v766 = vunpack.c.l.b16 %v154
    %v767 = vunpack.c.h.b16 %v154
    %v768 = vunpack.c.l.b16 %v155
    %v769 = vunpack.c.l.b16 %v156
    %v770 = vunpack.c.h.b16 %v156
    %v771 = vunpack.c.l.b16 %v157
    %v772 = vunpack.c.l.b16 %v158
    %v773 = vunpack.c.h.b16 %v158
    %v774 = vunpack.c.l.b16 %v159
    %v775 = vunpack.c.l.b16 %v160
    %v776 = vunpack.c.h.b16 %v160
    %v777 = vunpack.c.l.b16 %v161
    %v778 = vunpack.c.l.b16 %v162
    %v779 = vunpack.c.h.b16 %v162
    %v780 = vunpack.c.l.b16 %v163
    %v781 = vunpack.c.l.b16 %v164
    %v782 = vunpack.c.h.b16 %v164
    %v783 = vunpack.c.l.b16 %v165
    %v784 = vunpack.c.l.b16 %v166
    %v785 = vunpack.c.h.b16 %v166
    %v786 = vunpack.c.l.b16 %v167
    %v787 = vunpack.c.l.b16 %v168
    %v788 = vunpack.c.h.b16 %v168
    %v789 = vunpack.c.l.b16 %v169
    %v790 = vunpack.c.l.b16 %v170
    %v791 = vunpack.c.h.b16 %v170
    %v792 = vunpack.c.l.b16 %v171
    %v793 = vunpack.c.l.b16 %v172
    %v794 = vunpack.c.h.b16 %v172
    %v795 = vunpack.c.l.b16 %v173
    %v796 = vunpack.c.l.b16 %v174
    %v797 = vunpack.c.h.b16 %v174
    %v798 = vunpack.c.l.b16 %v175
    %v799 = vunpack.c.l.b16 %v176
    %v800 = vunpack.c.h.b16 %v176
    %v801 = vunpack.c.l.b16 %v177
    %v802 = vunpack.c.l.b16 %v178
    %v803 = vunpack.c.h.b16 %v178
    %v804 = vunpack.c.l.b16 %v179
    %v805 = vunpack.c.l.b16 %v180
    %v806 = vunpack.c.h.b16 %v180
    %v807 = vunpack.c.l.b16 %v181
    %v808 = vunpack.c.l.b16 %v182
    %v809 = vunpack.c.h.b16 %v182
    %v810 = vunpack.c.l.b16 %v183
    %v811 = vunpack.c.l.b16 %v184
    %v812 = vunpack.c.h.b16 %v184
    %v813 = vunpack.c.l.b16 %v185
    %v814 = vunpack.c.l.b16 %v186
    %v815 = vunpack.c.h.b16 %v186
    %v816 = vunpack.c.l.b16 %v187
    %v817 = vunpack.c.l.b16 %v188
    %v818 = vunpack.c.h.b16 %v188
    %v819 = vunpack.c.l.b16 %v189
    %v820 = vunpack.c.l.b16 %v190
    %v821 = vunpack.c.h.b16 %v190
    %v822 = vunpack.c.l.b16 %v191
    %v823 = vunpack.c.l.b16 %v192
    %v824 = vunpack.c.h.b16 %v192
    %v825 = vunpack.c.l.b16 %v193
    %v826 = vunpack.c.l.b16 %v194
    %v827 = vunpack.c.h.b16 %v194
    %v828 = vunpack.c.l.b16 %v195
    %v829 = vunpack.c.l.b16 %v196
    %v830 = vunpack.c.h.b16 %v196
    %v831 = vunpack.c.l.b16 %v197
    %v832 = vunpack.c.l.b16 %v198
    %v833 = vunpack.c.h.b16 %v198
    %v834 = vunpack.c.l.b16 %v199
    %v835 = vunpack.c.l.b16 %v200
    %v836 = vunpack.c.h.b16 %v200
    %v837 = vunpack.c.l.b16 %v201
    %v838 = vunpack.c.l.b16 %v202
    %v839 = vunpack.c.h.b16 %v202
    %v840 = vunpack.c.l.b16 %v203
    %v841 = vunpack.c.l.b16 %v204
    %v842 = vunpack.c.h.b16 %v204
    %v843 = vunpack.c.l.b16 %v205
    %v844 = vunpack.c.l.b16 %v206
    %v845 = vunpack.c.h.b16 %v206
    %v846 = vunpack.c.l.b16 %v207
    %v847 = vunpack.c.l.b16 %v208
    %v848 = vunpack.c.h.b16 %v208
    %v849 = vunpack.c.l.b16 %v209
    %v850 = vunpack.c.l.b16 %v210
    %v851 = vunpack.c.h.b16 %v210
    %v852 = vunpack.c.l.b16 %v211
    %v853 = vunpack.c.l.b16 %v212
    %v854 = vunpack.c.h.b16 %v212
    %v855 = vunpack.c.l.b16 %v213
    %v856 = vunpack.c.l.b16 %v214
    %v857 = vunpack.c.h.b16 %v214
    %v858 = vunpack.c.l.b16 %v215
    %v859 = vunpack.c.l.b16 %v216
    %v860 = vunpack.c.h.b16 %v216
    %v861 = vunpack.c.l.b16 %v217
    %v862 = vunpack.c.l.b16 %v218
    %v863 = vunpack.c.h.b16 %v218
    %v864 = vunpack.c.l.b16 %v219
    %v865 = vunpack.c.l.b16 %v220
    %v866 = vunpack.c.h.b16 %v220
    %v867 = vunpack.c.l.b16 %v221
    %v868 = vunpack.c.l.b16 %v222
    %v869 = vunpack.c.h.b16 %v222
    %v870 = vunpack.c.l.b16 %v223
    %v871 = vunpack.c.l.b16 %v224
    %v872 = vunpack.c.h.b16 %v224
    %v873 = vunpack.c.l.b16 %v225
    %v874 = vunpack.c.l.b16 %v226
    %v875 = vunpack.c.h.b16 %v226
    %v876 = vunpack.c.l.b16 %v227
    %v877 = vunpack.c.l.b16 %v228
    %v878 = vunpack.c.h.b16 %v228
    %v879 = vunpack.c.l.b16 %v229
    %v880 = vunpack.c.l.b16 %v230
    %v881 = vunpack.c.h.b16 %v230
    %v882 = vunpack.c.l.b16 %v231
    %v883 = vunpack.c.l.b16 %v232
    %v884 = vunpack.c.h.b16 %v232
    %v885 = vunpack.c.l.b16 %v233
    %v886 = vunpack.c.l.b16 %v234
    %v887 = vunpack.c.h.b16 %v234
    %v888 = vunpack.c.l.b16 %v235
    %v889 = vunpack.c.l.b16 %v236
    %v890 = vunpack.c.h.b16 %v236
    %v891 = vunpack.c.l.b16 %v237
    %v892 = vunpack.c.l.b16 %v238
    %v893 = vunpack.c.h.b16 %v238
    %v894 = vunpack.c.l.b16 %v239
    %v895 = vunpack.c.l.b16 %v240
    %v896 = vunpack.c.h.b16 %v240
    %v897 = vunpack.c.l.b16 %v241
    %v898 = vunpack.c.l.b16 %v242
    %v899 = vunpack.c.h.b16 %v242
    %v900 = vunpack.c.l.b16 %v243
    %v901 = vunpack.c.l.b16 %v244
    %v902 = vunpack.c.h.b16 %v244
    %v903 = vunpack.c.l.b16 %v245
    %v904 = vunpack.c.l.b16 %v246
    %v905 = vunpack.c.h.b16 %v246
    %v906 = vunpack.c.l.b16 %v247
    %v907 = vunpack.c.l.b16 %v248
    %v908 = vunpack.c.h.b16 %v248
    %v909 = vunpack.c.l.b16 %v249
    %v910 = vunpack.c.l.b16 %v250
    %v911 = vunpack.c.h.b16 %v250
    %v912 = vunpack.c.l.b16 %v251
    %v913 = vunpack.c.l.b16 %v252
    %v914 = vunpack.c.h.b16 %v252
    %v915 = vunpack.c.l.b16 %v253
    %v916 = vunpack.c.l.b16 %v254
    %v917 = vunpack.c.h.b16 %v254
    %v918 = vunpack.c.l.b16 %v255
    %v919 = vunpack.c.l.b16 %v256
    %v920 = vunpack.c.h.b16 %v256
    %v921 = vunpack.c.l.b16 %v257
    %v922 = vunpack.c.l.b16 %v258
    %v923 = vunpack.c.h.b16 %v258
    %v924 = vunpack.c.l.b16 %v259
    %v925 = vunpack.c.l.b16 %v260
    %v926 = vunpack.c.h.b16 %v260
    %v927 = vunpack.c.l.b16 %v261
    %v928 = vunpack.c.l.b16 %v262
    %v929 = vunpack.c.h.b16 %v262
    %v930 = vunpack.c.l.b16 %v263
    %v931 = vunpack.c.l.b16 %v264
    %v932 = vunpack.c.h.b16 %v264
    %v933 = vunpack.c.l.b16 %v265
    %v934 = vunpack.c.l.b16 %v266
    %v935 = vunpack.c.h.b16 %v266
    %v936 = vunpack.c.l.b16 %v267
    %v937 = vunpack.c.l.b16 %v268
    %v938 = vunpack.c.h.b16 %v268
    %v939 = vunpack.c.l.b16 %v269
    %v940 = vunpack.c.l.b16 %v270
    %v941 = vunpack.c.h.b16 %v270
    %v942 = vunpack.c.l.b16 %v271
    %v943 = vunpack.c.l.b16 %v272
    %v944 = vunpack.c.h.b16 %v272
    %v945 = vunpack.c.l.b16 %v273
    %v946 = vunpack.c.l.b16 %v274
    %v947 = vunpack.c.h.b16 %v274
    %v948 = vunpack.c.l.b16 %v275
    %v949 = vunpack.c.l.b16 %v276
    %v950 = vunpack.c.h.b16 %v276
    %v951 = vunpack.c.l.b16 %v277
    %v952 = vunpack.c.l.b16 %v278
    %v953 = vunpack.c.h.b16 %v278
    %v954 = vunpack.c.l.b16 %v279
    %v955 = vunpack.c.l.b16 %v280
    %v956 = vunpack.c.h.b16 %v280
    %v957 = vunpack.c.l.b16 %v281
    %v958 = vunpack.c.l.b16 %v282
    %v959 = vunpack.c.h.b16 %v282
    %v960 = vunpack.c.l.b16 %v283
    %v961 = vunpack.c.l.b16 %v284
    %v962 = vunpack.c.h.b16 %v284
    %v963 = vunpack.c.l.b16 %v285
    %v964 = vunpack.c.l.b16 %v286
    %v965 = vunpack.c.h.b16 %v286
    %v966 = vunpack.c.l.b16 %v287
    %v967 = vunpack.c.l.b16 %v288
    %v968 = vunpack.c.h.b16 %v288
    %v969 = vunpack.c.l.b16 %v289
    %v970 = vunpack.c.l.b16 %v290
    %v971 = vunpack.c.h.b16 %v290
    %v972 = vunpack.c.l.b16 %v291
    %v973 = vunpack.c.l.b16 %v292
    %v974 = vunpack.c.h.b16 %v292
    %v975 = vunpack.c.l.b16 %v293
    %v976 = vunpack.c.l.b16 %v294
    %v977 = vunpack.c.h.b16 %v294
    %v978 = vunpack.c.l.b16 %v295
    %v979 = vunpack.c.l.b16 %v296
    %v980 = vunpack.c.h.b16 %v296
    %v981 = vunpack.c.l.b16 %v297
    %v982 = vunpack.c.l.b16 %v298
    %v983 = vunpack.c.h.b16 %v298
    %v984 = vunpack.c.l.b16 %v299
    %v985 = vunpack.c.l.b16 %v300
    %v986 = vunpack.c.h.b16 %v300
    %v987 = vunpack.c.l.b16 %v301
    %v988 = vunpack.c.l.b16 %v302
    %v989 = vunpack.c.h.b16 %v302
    %v990 = vunpack.c.l.b16 %v303
    %v991 = vunpack.c.l.b16 %v304
    %v992 = vunpack.c.h.b16 %v304
    %v993 = vunpack.c.l.b16 %v305
    %v994 = vpack.c.b16 %v613, %v610
    %v995 = vpack.c.b16 %v614, %v611
    %v996 = vpack.c.b16 %v615, %v612
    %v997 = vpack.c.b16 %v619, %v616
    %v998 = vpack.c.b16 %v620, %v617
    %v999 = vpack.c.b16 %v621, %v618
    %v1000 = vpack.c.b16 %v625, %v622
    %v1001 = vpack.c.b16 %v626, %v623
    %v1002 = vpack.c.b16 %v627, %v624
    %v1003 = vpack.c.b16 %v631, %v628
    %v1004 = vpack.c.b16 %v632, %v629
    %v1005 = vpack.c.b16 %v633, %v630
    %v1006 = vpack.c.b16 %v637, %v634
    %v1007 = vpack.c.b16 %v638, %v635
    %v1008 = vpack.c.b16 %v639, %v636
    %v1009 = vpack.c.b16 %v643, %v640
    %v1010 = vpack.c.b16 %v644, %v641
    %v1011 = vpack.c.b16 %v645, %v642
    %v1012 = vpack.c.b16 %v649, %v646
    %v1013 = vpack.c.b16 %v650, %v647
    %v1014 = vpack.c.b16 %v651, %v648
    %v1015 = vpack.c.b16 %v655, %v652
    %v1016 = vpack.c.b16 %v656, %v653
    %v1017 = vpack.c.b16 %v657, %v654
    %v1018 = vpack.c.b16 %v661, %v658
    %v1019 = vpack.c.b16 %v662, %v659
    %v1020 = vpack.c.b16 %v663, %v660
    %v1021 = vpack.c.b16 %v667, %v664
    %v1022 = vpack.c.b16 %v668, %v665
    %v1023 = vpack.c.b16 %v669, %v666
    %v1024 = vpack.c.b16 %v673, %v670
    %v1025 = vpack.c.b16 %v674, %v671
    %v1026 = vpack.c.b16 %v675, %v672
    %v1027 = vpack.c.b16 %v679, %v676
    %v1028 = vpack.c.b16 %v680, %v677
    %v1029 = vpack.c.b16 %v681, %v678
    %v1030 = vpack.c.b16 %v685, %v682
    %v1031 = vpack.c.b16 %v686, %v683
    %v1032 = vpack.c.b16 %v687, %v684
    %v1033 = vpack.c.b16 %v691, %v688
    %v1034 = vpack.c.b16 %v692, %v689
    %v1035 = vpack.c.b16 %v693, %v690
    %v1036 = vpack.c.b16 %v697, %v694
    %v1037 = vpack.c.b16 %v698, %v695
    %v1038 = vpack.c.b16 %v699, %v696
    %v1039 = vpack.c.b16 %v703, %v700
    %v1040 = vpack.c.b16 %v704, %v701
    %v1041 = vpack.c.b16 %v705, %v702
    %v1042 = vpack.c.b16 %v709, %v706
    %v1043 = vpack.c.b16 %v710, %v707
    %v1044 = vpack.c.b16 %v711, %v708
    %v1045 = vpack.c.b16 %v715, %v712
    %v1046 = vpack.c.b16 %v716, %v713
    %v1047 = vpack.c.b16 %v717, %v714
    %v1048 = vpack.c.b16 %v721, %v718
    %v1049 = vpack.c.b16 %v722, %v719
    %v1050 = vpack.c.b16 %v723, %v720
    %v1051 = vpack.c.b16 %v727, %v724
    %v1052 = vpack.c.b16 %v728, %v725
    %v1053 = vpack.c.b16 %v729, %v726
    %v1054 = vpack.c.b16 %v733, %v730
    %v1055 = vpack.c.b16 %v734, %v731
    %v1056 = vpack.c.b16 %v735, %v732
    %v1057 = vpack.c.b16 %v739, %v736
    %v1058 = vpack.c.b16 %v740, %v737
    %v1059 = vpack.c.b16 %v741, %v738
    %v1060 = vpack.c.b16 %v745, %v742
    %v1061 = vpack.c.b16 %v746, %v743
    %v1062 = vpack.c.b16 %v747, %v744
    %v1063 = vpack.c.b16 %v751, %v748
    %v1064 = vpack.c.b16 %v752, %v749
    %v1065 = vpack.c.b16 %v753, %v750
    %v1066 = vpack.c.b16 %v757, %v754
    %v1067 = vpack.c.b16 %v758, %v755
    %v1068 = vpack.c.b16 %v759, %v756
    %v1069 = vpack.c.b16 %v763, %v760
    %v1070 = vpack.c.b16 %v764, %v761
    %v1071 = vpack.c.b16 %v765, %v762
    %v1072 = vpack.c.b16 %v769, %v766
    %v1073 = vpack.c.b16 %v770, %v767
    %v1074 = vpack.c.b16 %v771, %v768
    %v1075 = vpack.c.b16 %v775, %v772
    %v1076 = vpack.c.b16 %v776, %v773
    %v1077 = vpack.c.b16 %v777, %v774
    %v1078 = vpack.c.b16 %v781, %v778
    %v1079 = vpack.c.b16 %v782, %v779
    %v1080 = vpack.c.b16 %v783, %v780
    %v1081 = vpack.c.b16 %v787, %v784
    %v1082 = vpack.c.b16 %v788, %v785
    %v1083 = vpack.c.b16 %v789, %v786
    %v1084 = vpack.c.b16 %v793, %v790
    %v1085 = vpack.c.b16 %v794, %v791
    %v1086 = vpack.c.b16 %v795, %v792
    %v1087 = vpack.c.b16 %v799, %v796
    %v1088 = vpack.c.b16 %v800, %v797
    %v1089 = vpack.c.b16 %v801, %v798
    %v1090 = vpack.c.b16 %v805, %v802
    %v1091 = vpack.c.b16 %v806, %v803
    %v1092 = vpack.c.b16 %v807, %v804
    %v1093 = vpack.c.b16 %v811, %v808
    %v1094 = vpack.c.b16 %v812, %v809
    %v1095 = vpack.c.b16 %v813, %v810
    %v1096 = vpack.c.b16 %v817, %v814
    %v1097 = vpack.c.b16 %v818, %v815
    %v1098 = vpack.c.b16 %v819, %v816
    %v1099 = vpack.c.b16 %v823, %v820
    %v1100 = vpack.c.b16 %v824, %v821
    %v1101 = vpack.c.b16 %v825, %v822
    %v1102 = vpack.c.b16 %v829, %v826
    %v1103 = vpack.c.b16 %v830, %v827
    %v1104 = vpack.c.b16 %v831, %v828
    %v1105 = vpack.c.b16 %v835, %v832
    %v1106 = vpack.c.b16 %v836, %v833
    %v1107 = vpack.c.b16 %v837, %v834
    %v1108 = vpack.c.b16 %v841, %v838
    %v1109 = vpack.c.b16 %v842, %v839
    %v1110 = vpack.c.b16 %v843, %v840
    %v1111 = vpack.c.b16 %v847, %v844
    %v1112 = vpack.c.b16 %v848, %v845
    %v1113 = vpack.c.b16 %v849, %v846
    %v1114 = vpack.c.b16 %v853, %v850
    %v1115 = vpack.c.b16 %v854, %v851
    %v1116 = vpack.c.b16 %v855, %v852
    %v1117 = vpack.c.b16 %v859, %v856
    %v1118 = vpack.c.b16 %v860, %v857
    %v1119 = vpack.c.b16 %v861, %v858
    %v1120 = vpack.c.b16 %v865, %v862
    %v1121 = vpack.c.b16 %v866, %v863
    %v1122 = vpack.c.b16 %v867, %v864
    %v1123 = vpack.c.b16 %v871, %v868
    %v1124 = vpack.c.b16 %v872, %v869
    %v1125 = vpack.c.b16 %v873, %v870
    %v1126 = vpack.c.b16 %v877, %v874
    %v1127 = vpack.c.b16 %v878, %v875
    %v1128 = vpack.c.b16 %v879, %v876
    %v1129 = vpack.c.b16 %v883, %v880
    %v1130 = vpack.c.b16 %v884, %v881
    %v1131 = vpack.c.b16 %v885, %v882
    %v1132 = vpack.c.b16 %v889, %v886
    %v1133 = vpack.c.b16 %v890, %v887
    %v1134 = vpack.c.b16 %v891, %v888
    %v1135 = vpack.c.b16 %v895, %v892
    %v1136 = vpack.c.b16 %v896, %v893
    %v1137 = vpack.c.b16 %v897, %v894
    %v1138 = vpack.c.b16 %v901, %v898
    %v1139 = vpack.c.b16 %v902, %v899
    %v1140 = vpack.c.b16 %v903, %v900
    %v1141 = vpack.c.b16 %v907, %v904
    %v1142 = vpack.c.b16 %v908, %v905
    %v1143 = vpack.c.b16 %v909, %v906
    %v1144 = vpack.c.b16 %v913, %v910
    %v1145 = vpack.c.b16 %v914, %v911
    %v1146 = vpack.c.b16 %v915, %v912
    %v1147 = vpack.c.b16 %v919, %v916
    %v1148 = vpack.c.b16 %v920, %v917
    %v1149 = vpack.c.b16 %v921, %v918
    %v1150 = vpack.c.b16 %v925, %v922
    %v1151 = vpack.c.b16 %v926, %v923
    %v1152 = vpack.c.b16 %v927, %v924
    %v1153 = vpack.c.b16 %v931, %v928
    %v1154 = vpack.c.b16 %v932, %v929
    %v1155 = vpack.c.b16 %v933, %v930
    %v1156 = vpack.c.b16 %v937, %v934
    %v1157 = vpack.c.b16 %v938, %v935
    %v1158 = vpack.c.b16 %v939, %v936
    %v1159 = vpack.c.b16 %v943, %v940
    %v1160 = vpack.c.b16 %v944, %v941
    %v1161 = vpack.c.b16 %v945, %v942
    %v1162 = vpack.c.b16 %v949, %v946
    %v1163 = vpack.c.b16 %v950, %v947
    %v1164 = vpack.c.b16 %v951, %v948
    %v1165 = vpack.c.b16 %v955, %v952
    %v1166 = vpack.c.b16 %v956, %v953
    %v1167 = vpack.c.b16 %v957, %v954
    %v1168 = vpack.c.b16 %v961, %v958
    %v1169 = vpack.c.b16 %v962, %v959
    %v1170 = vpack.c.b16 %v963, %v960
    %v1171 = vpack.c.b16 %v967, %v964
    %v1172 = vpack.c.b16 %v968, %v965
    %v1173 = vpack.c.b16 %v969, %v966
    %v1174 = vpack.c.b16 %v973, %v970
    %v1175 = vpack.c.b16 %v974, %v971
    %v1176 = vpack.c.b16 %v975, %v972
    %v1177 = vpack.c.b16 %v979, %v976
    %v1178 = vpack.c.b16 %v980, %v977
    %v1179 = vpack.c.b16 %v981, %v978
    %v1180 = vpack.c.b16 %v985, %v982
    %v1181 = vpack.c.b16 %v986, %v983
    %v1182 = vpack.c.b16 %v987, %v984
    %v1183 = vpack.c.b16 %v991, %v988
    %v1184 = vpack.c.b16 %v992, %v989
    %v1185 = vpack.c.b16 %v993, %v990
    %1378 = vmatpush.bf16.msra.mxu0 %v1015
    %1379 = vmatpush.bf16.msra.mxu0 %v1012
    %1380 = vmatpush.bf16.msra.mxu0 %v1009
    %1381 = vmatpush.bf16.msra.mxu0 %v1006
    %1382 = vmatpush.bf16.msra.mxu0 %v1003
    %1383 = vmatpush.bf16.msra.mxu0 %v1000
    %1384 = vmatpush.bf16.msra.mxu0 %v997
    %1385 = vmatpush.bf16.msra.mxu0 %v994
    %1386 = vmatmul.bf16.gmra.mxu0 %v338
    %v1387 = vpop.f32.mrf.mxu0
    %v1388 = vadd.f32 %v308, %v1387
    %v1389 = vpop.f32.mrf.mxu0
    %v1390 = vadd.f32 %v308, %v1389
    %1391 = vdwg.mxu0
    %1392 = vmatpush.bf16.msra.mxu0 %v1039
    %1393 = vmatpush.bf16.msra.mxu0 %v1036
    %1394 = vmatpush.bf16.msra.mxu0 %v1033
    %1395 = vmatpush.bf16.msra.mxu0 %v1030
    %1396 = vmatpush.bf16.msra.mxu0 %v1027
    %1397 = vmatpush.bf16.msra.mxu0 %v1024
    %1398 = vmatpush.bf16.msra.mxu0 %v1021
    %1399 = vmatpush.bf16.msra.mxu0 %v1018
    %1400 = vmatmul.bf16.gmra.mxu0 %v339
    %v1401 = vpop.f32.mrf.mxu0
    %v1402 = vadd.f32 %v1388, %v1401
    %v1403 = vpop.f32.mrf.mxu0
    %v1404 = vadd.f32 %v1390, %v1403
    %1405 = vdwg.mxu0
    %1406 = vmatpush.bf16.msra.mxu0 %v1063
    %1407 = vmatpush.bf16.msra.mxu0 %v1060
    %1408 = vmatpush.bf16.msra.mxu0 %v1057
    %1409 = vmatpush.bf16.msra.mxu0 %v1054
    %1410 = vmatpush.bf16.msra.mxu0 %v1051
    %1411 = vmatpush.bf16.msra.mxu0 %v1048
    %1412 = vmatpush.bf16.msra.mxu0 %v1045
    %1413 = vmatpush.bf16.msra.mxu0 %v1042
    %1414 = vmatmul.bf16.gmra.mxu0 %v340
    %v1415 = vpop.f32.mrf.mxu0
    %v1416 = vadd.f32 %v1402, %v1415
    %v1417 = vpop.f32.mrf.mxu0
    %v1418 = vadd.f32 %v1404, %v1417
    %1419 = vdwg.mxu0
    %1420 = vmatpush.bf16.msra.mxu0 %v1087
    %1421 = vmatpush.bf16.msra.mxu0 %v1084
    %1422 = vmatpush.bf16.msra.mxu0 %v1081
    %1423 = vmatpush.bf16.msra.mxu0 %v1078
    %1424 = vmatpush.bf16.msra.mxu0 %v1075
    %1425 = vmatpush.bf16.msra.mxu0 %v1072
    %1426 = vmatpush.bf16.msra.mxu0 %v1069
    %1427 = vmatpush.bf16.msra.mxu0 %v1066
    %1428 = vmatmul.bf16.gmra.mxu0 %v341
    %v1429 = vpop.f32.mrf.mxu0
    %v1430 = vadd.f32 %v1416, %v1429
    %v1431 = vpop.f32.mrf.mxu0
    %v1432 = vadd.f32 %v1418, %v1431
    %1433 = vdwg.mxu0
    %1434 = vmatpush.bf16.msra.mxu0 %v1111
    %1435 = vmatpush.bf16.msra.mxu0 %v1108
    %1436 = vmatpush.bf16.msra.mxu0 %v1105
    %1437 = vmatpush.bf16.msra.mxu0 %v1102
    %1438 = vmatpush.bf16.msra.mxu0 %v1099
    %1439 = vmatpush.bf16.msra.mxu0 %v1096
    %1440 = vmatpush.bf16.msra.mxu0 %v1093
    %1441 = vmatpush.bf16.msra.mxu0 %v1090
    %1442 = vmatmul.bf16.gmra.mxu0 %v342
    %v1443 = vpop.f32.mrf.mxu0
    %v1444 = vadd.f32 %v1430, %v1443
    %v1445 = vpop.f32.mrf.mxu0
    %v1446 = vadd.f32 %v1432, %v1445
    %1447 = vdwg.mxu0
    %1448 = vmatpush.bf16.msra.mxu0 %v1135
    %1449 = vmatpush.bf16.msra.mxu0 %v1132
    %1450 = vmatpush.bf16.msra.mxu0 %v1129
    %1451 = vmatpush.bf16.msra.mxu0 %v1126
    %1452 = vmatpush.bf16.msra.mxu0 %v1123
    %1453 = vmatpush.bf16.msra.mxu0 %v1120
    %1454 = vmatpush.bf16.msra.mxu0 %v1117
    %1455 = vmatpush.bf16.msra.mxu0 %v1114
    %1456 = vmatmul.bf16.gmra.mxu0 %v343
    %v1457 = vpop.f32.mrf.mxu0
    %v1458 = vadd.f32 %v1444, %v1457
    %v1459 = vpop.f32.mrf.mxu0
    %v1460 = vadd.f32 %v1446, %v1459
    %1461 = vdwg.mxu0
    %1462 = vmatpush.bf16.msra.mxu0 %v1159
    %1463 = vmatpush.bf16.msra.mxu0 %v1156
    %1464 = vmatpush.bf16.msra.mxu0 %v1153
    %1465 = vmatpush.bf16.msra.mxu0 %v1150
    %1466 = vmatpush.bf16.msra.mxu0 %v1147
    %1467 = vmatpush.bf16.msra.mxu0 %v1144
    %1468 = vmatpush.bf16.msra.mxu0 %v1141
    %1469 = vmatpush.bf16.msra.mxu0 %v1138
    %1470 = vmatmul.bf16.gmra.mxu0 %v344
    %v1471 = vpop.f32.mrf.mxu0
    %v1472 = vadd.f32 %v1458, %v1471
    %v1473 = vpop.f32.mrf.mxu0
    %v1474 = vadd.f32 %v1460, %v1473
    %1475 = vdwg.mxu0
    %1476 = vmatpush.bf16.msra.mxu0 %v1183
    %1477 = vmatpush.bf16.msra.mxu0 %v1180
    %1478 = vmatpush.bf16.msra.mxu0 %v1177
    %1479 = vmatpush.bf16.msra.mxu0 %v1174
    %1480 = vmatpush.bf16.msra.mxu0 %v1171
    %1481 = vmatpush.bf16.msra.mxu0 %v1168
    %1482 = vmatpush.bf16.msra.mxu0 %v1165
    %1483 = vmatpush.bf16.msra.mxu0 %v1162
    %1484 = vmatmul.bf16.gmra.mxu0 %v345
    %v1485 = vpop.f32.mrf.mxu0
    %v1486 = vadd.f32 %v1472, %v1485
    %v1487 = vpop.f32.mrf.mxu0
    %v1488 = vadd.f32 %v1474, %v1487
    %1489 = vdwg.mxu0
    %1490 = vmatpush.bf16.msra.mxu0 %v1016
    %1491 = vmatpush.bf16.msra.mxu0 %v1013
    %1492 = vmatpush.bf16.msra.mxu0 %v1010
    %1493 = vmatpush.bf16.msra.mxu0 %v1007
    %1494 = vmatpush.bf16.msra.mxu0 %v1004
    %1495 = vmatpush.bf16.msra.mxu0 %v1001
    %1496 = vmatpush.bf16.msra.mxu0 %v998
    %1497 = vmatpush.bf16.msra.mxu0 %v995
    %1498 = vmatmul.bf16.gmra.mxu0 %v338
    %v1499 = vpop.f32.mrf.mxu0
    %v1500 = vadd.f32 %v309, %v1499
    %v1501 = vpop.f32.mrf.mxu0
    %v1502 = vadd.f32 %v309, %v1501
    %1503 = vdwg.mxu0
    %1504 = vmatpush.bf16.msra.mxu0 %v1040
    %1505 = vmatpush.bf16.msra.mxu0 %v1037
    %1506 = vmatpush.bf16.msra.mxu0 %v1034
    %1507 = vmatpush.bf16.msra.mxu0 %v1031
    %1508 = vmatpush.bf16.msra.mxu0 %v1028
    %1509 = vmatpush.bf16.msra.mxu0 %v1025
    %1510 = vmatpush.bf16.msra.mxu0 %v1022
    %1511 = vmatpush.bf16.msra.mxu0 %v1019
    %1512 = vmatmul.bf16.gmra.mxu0 %v339
    %v1513 = vpop.f32.mrf.mxu0
    %v1514 = vadd.f32 %v1500, %v1513
    %v1515 = vpop.f32.mrf.mxu0
    %v1516 = vadd.f32 %v1502, %v1515
    %1517 = vdwg.mxu0
    %1518 = vmatpush.bf16.msra.mxu0 %v1064
    %1519 = vmatpush.bf16.msra.mxu0 %v1061
    %1520 = vmatpush.bf16.msra.mxu0 %v1058
    %1521 = vmatpush.bf16.msra.mxu0 %v1055
    %1522 = vmatpush.bf16.msra.mxu0 %v1052
    %1523 = vmatpush.bf16.msra.mxu0 %v1049
    %1524 = vmatpush.bf16.msra.mxu0 %v1046
    %1525 = vmatpush.bf16.msra.mxu0 %v1043
    %1526 = vmatmul.bf16.gmra.mxu0 %v340
    %v1527 = vpop.f32.mrf.mxu0
    %v1528 = vadd.f32 %v1514, %v1527
    %v1529 = vpop.f32.mrf.mxu0
    %v1530 = vadd.f32 %v1516, %v1529
    %1531 = vdwg.mxu0
    %1532 = vmatpush.bf16.msra.mxu0 %v1088
    %1533 = vmatpush.bf16.msra.mxu0 %v1085
    %1534 = vmatpush.bf16.msra.mxu0 %v1082
    %1535 = vmatpush.bf16.msra.mxu0 %v1079
    %1536 = vmatpush.bf16.msra.mxu0 %v1076
    %1537 = vmatpush.bf16.msra.mxu0 %v1073
    %1538 = vmatpush.bf16.msra.mxu0 %v1070
    %1539 = vmatpush.bf16.msra.mxu0 %v1067
    %1540 = vmatmul.bf16.gmra.mxu0 %v341
    %v1541 = vpop.f32.mrf.mxu0
    %v1542 = vadd.f32 %v1528, %v1541
    %v1543 = vpop.f32.mrf.mxu0
    %v1544 = vadd.f32 %v1530, %v1543
    %1545 = vdwg.mxu0
    %1546 = vmatpush.bf16.msra.mxu0 %v1112
    %1547 = vmatpush.bf16.msra.mxu0 %v1109
    %1548 = vmatpush.bf16.msra.mxu0 %v1106
    %1549 = vmatpush.bf16.msra.mxu0 %v1103
    %1550 = vmatpush.bf16.msra.mxu0 %v1100
    %1551 = vmatpush.bf16.msra.mxu0 %v1097
    %1552 = vmatpush.bf16.msra.mxu0 %v1094
    %1553 = vmatpush.bf16.msra.mxu0 %v1091
    %1554 = vmatmul.bf16.gmra.mxu0 %v342
    %v1555 = vpop.f32.mrf.mxu0
    %v1556 = vadd.f32 %v1542, %v1555
    %v1557 = vpop.f32.mrf.mxu0
    %v1558 = vadd.f32 %v1544, %v1557
    %1559 = vdwg.mxu0
    %1560 = vmatpush.bf16.msra.mxu0 %v1136
    %1561 = vmatpush.bf16.msra.mxu0 %v1133
    %1562 = vmatpush.bf16.msra.mxu0 %v1130
    %1563 = vmatpush.bf16.msra.mxu0 %v1127
    %1564 = vmatpush.bf16.msra.mxu0 %v1124
    %1565 = vmatpush.bf16.msra.mxu0 %v1121
    %1566 = vmatpush.bf16.msra.mxu0 %v1118
    %1567 = vmatpush.bf16.msra.mxu0 %v1115
    %1568 = vmatmul.bf16.gmra.mxu0 %v343
    %v1569 = vpop.f32.mrf.mxu0
    %v1570 = vadd.f32 %v1556, %v1569
    %v1571 = vpop.f32.mrf.mxu0
    %v1572 = vadd.f32 %v1558, %v1571
    %1573 = vdwg.mxu0
    %1574 = vmatpush.bf16.msra.mxu0 %v1160
    %1575 = vmatpush.bf16.msra.mxu0 %v1157
    %1576 = vmatpush.bf16.msra.mxu0 %v1154
    %1577 = vmatpush.bf16.msra.mxu0 %v1151
    %1578 = vmatpush.bf16.msra.mxu0 %v1148
    %1579 = vmatpush.bf16.msra.mxu0 %v1145
    %1580 = vmatpush.bf16.msra.mxu0 %v1142
    %1581 = vmatpush.bf16.msra.mxu0 %v1139
    %1582 = vmatmul.bf16.gmra.mxu0 %v344
    %v1583 = vpop.f32.mrf.mxu0
    %v1584 = vadd.f32 %v1570, %v1583
    %v1585 = vpop.f32.mrf.mxu0
    %v1586 = vadd.f32 %v1572, %v1585
    %1587 = vdwg.mxu0
    %1588 = vmatpush.bf16.msra.mxu0 %v1184
    %1589 = vmatpush.bf16.msra.mxu0 %v1181
    %1590 = vmatpush.bf16.msra.mxu0 %v1178
    %1591 = vmatpush.bf16.msra.mxu0 %v1175
    %1592 = vmatpush.bf16.msra.mxu0 %v1172
    %1593 = vmatpush.bf16.msra.mxu0 %v1169
    %1594 = vmatpush.bf16.msra.mxu0 %v1166
    %1595 = vmatpush.bf16.msra.mxu0 %v1163
    %1596 = vmatmul.bf16.gmra.mxu0 %v345
    %v1597 = vpop.f32.mrf.mxu0
    %v1598 = vadd.f32 %v1584, %v1597
    %v1599 = vpop.f32.mrf.mxu0
    %v1600 = vadd.f32 %v1586, %v1599
    %1601 = vdwg.mxu0
    %1602 = vmatpush.bf16.msra.mxu0 %v1017
    %1603 = vmatpush.bf16.msra.mxu0 %v1014
    %1604 = vmatpush.bf16.msra.mxu0 %v1011
    %1605 = vmatpush.bf16.msra.mxu0 %v1008
    %1606 = vmatpush.bf16.msra.mxu0 %v1005
    %1607 = vmatpush.bf16.msra.mxu0 %v1002
    %1608 = vmatpush.bf16.msra.mxu0 %v999
    %1609 = vmatpush.bf16.msra.mxu0 %v996
    %1610 = vmatmul.bf16.gmra.mxu0 %v338
    %v1611 = vpop.f32.mrf.mxu0
    %v1612 = vadd.f32 %v310, %v1611
    %v1613 = vpop.f32.mrf.mxu0
    %v1614 = vadd.f32 %v310, %v1613
    %1615 = vdwg.mxu0
    %1616 = vmatpush.bf16.msra.mxu0 %v1041
    %1617 = vmatpush.bf16.msra.mxu0 %v1038
    %1618 = vmatpush.bf16.msra.mxu0 %v1035
    %1619 = vmatpush.bf16.msra.mxu0 %v1032
    %1620 = vmatpush.bf16.msra.mxu0 %v1029
    %1621 = vmatpush.bf16.msra.mxu0 %v1026
    %1622 = vmatpush.bf16.msra.mxu0 %v1023
    %1623 = vmatpush.bf16.msra.mxu0 %v1020
    %1624 = vmatmul.bf16.gmra.mxu0 %v339
    %v1625 = vpop.f32.mrf.mxu0
    %v1626 = vadd.f32 %v1612, %v1625
    %v1627 = vpop.f32.mrf.mxu0
    %v1628 = vadd.f32 %v1614, %v1627
    %1629 = vdwg.mxu0
    %1630 = vmatpush.bf16.msra.mxu0 %v1065
    %1631 = vmatpush.bf16.msra.mxu0 %v1062
    %1632 = vmatpush.bf16.msra.mxu0 %v1059
    %1633 = vmatpush.bf16.msra.mxu0 %v1056
    %1634 = vmatpush.bf16.msra.mxu0 %v1053
    %1635 = vmatpush.bf16.msra.mxu0 %v1050
    %1636 = vmatpush.bf16.msra.mxu0 %v1047
    %1637 = vmatpush.bf16.msra.mxu0 %v1044
    %1638 = vmatmul.bf16.gmra.mxu0 %v340
    %v1639 = vpop.f32.mrf.mxu0
    %v1640 = vadd.f32 %v1626, %v1639
    %v1641 = vpop.f32.mrf.mxu0
    %v1642 = vadd.f32 %v1628, %v1641
    %1643 = vdwg.mxu0
    %1644 = vmatpush.bf16.msra.mxu0 %v1089
    %1645 = vmatpush.bf16.msra.mxu0 %v1086
    %1646 = vmatpush.bf16.msra.mxu0 %v1083
    %1647 = vmatpush.bf16.msra.mxu0 %v1080
    %1648 = vmatpush.bf16.msra.mxu0 %v1077
    %1649 = vmatpush.bf16.msra.mxu0 %v1074
    %1650 = vmatpush.bf16.msra.mxu0 %v1071
    %1651 = vmatpush.bf16.msra.mxu0 %v1068
    %1652 = vmatmul.bf16.gmra.mxu0 %v341
    %v1653 = vpop.f32.mrf.mxu0
    %v1654 = vadd.f32 %v1640, %v1653
    %v1655 = vpop.f32.mrf.mxu0
    %v1656 = vadd.f32 %v1642, %v1655
    %1657 = vdwg.mxu0
    %1658 = vmatpush.bf16.msra.mxu0 %v1113
    %1659 = vmatpush.bf16.msra.mxu0 %v1110
    %1660 = vmatpush.bf16.msra.mxu0 %v1107
    %1661 = vmatpush.bf16.msra.mxu0 %v1104
    %1662 = vmatpush.bf16.msra.mxu0 %v1101
    %1663 = vmatpush.bf16.msra.mxu0 %v1098
    %1664 = vmatpush.bf16.msra.mxu0 %v1095
    %1665 = vmatpush.bf16.msra.mxu0 %v1092
    %1666 = vmatmul.bf16.gmra.mxu0 %v342
    %v1667 = vpop.f32.mrf.mxu0
    %v1668 = vadd.f32 %v1654, %v1667
    %v1669 = vpop.f32.mrf.mxu0
    %v1670 = vadd.f32 %v1656, %v1669
    %1671 = vdwg.mxu0
    %1672 = vmatpush.bf16.msra.mxu0 %v1137
    %1673 = vmatpush.bf16.msra.mxu0 %v1134
    %1674 = vmatpush.bf16.msra.mxu0 %v1131
    %1675 = vmatpush.bf16.msra.mxu0 %v1128
    %1676 = vmatpush.bf16.msra.mxu0 %v1125
    %1677 = vmatpush.bf16.msra.mxu0 %v1122
    %1678 = vmatpush.bf16.msra.mxu0 %v1119
    %1679 = vmatpush.bf16.msra.mxu0 %v1116
    %1680 = vmatmul.bf16.gmra.mxu0 %v343
    %v1681 = vpop.f32.mrf.mxu0
    %v1682 = vadd.f32 %v1668, %v1681
    %v1683 = vpop.f32.mrf.mxu0
    %v1684 = vadd.f32 %v1670, %v1683
    %1685 = vdwg.mxu0
    %1686 = vmatpush.bf16.msra.mxu0 %v1161
    %1687 = vmatpush.bf16.msra.mxu0 %v1158
    %1688 = vmatpush.bf16.msra.mxu0 %v1155
    %1689 = vmatpush.bf16.msra.mxu0 %v1152
    %1690 = vmatpush.bf16.msra.mxu0 %v1149
    %1691 = vmatpush.bf16.msra.mxu0 %v1146
    %1692 = vmatpush.bf16.msra.mxu0 %v1143
    %1693 = vmatpush.bf16.msra.mxu0 %v1140
    %1694 = vmatmul.bf16.gmra.mxu0 %v344
    %v1695 = vpop.f32.mrf.mxu0
    %v1696 = vadd.f32 %v1682, %v1695
    %v1697 = vpop.f32.mrf.mxu0
    %v1698 = vadd.f32 %v1684, %v1697
    %1699 = vdwg.mxu0
    %1700 = vmatpush.bf16.msra.mxu0 %v1185
    %1701 = vmatpush.bf16.msra.mxu0 %v1182
    %1702 = vmatpush.bf16.msra.mxu0 %v1179
    %1703 = vmatpush.bf16.msra.mxu0 %v1176
    %1704 = vmatpush.bf16.msra.mxu0 %v1173
    %1705 = vmatpush.bf16.msra.mxu0 %v1170
    %1706 = vmatpush.bf16.msra.mxu0 %v1167
    %1707 = vmatpush.bf16.msra.mxu0 %v1164
    %1708 = vmatmul.bf16.gmra.mxu0 %v345
    %v1709 = vpop.f32.mrf.mxu0
    %v1710 = vadd.f32 %v1696, %v1709
    %v1711 = vpop.f32.mrf.mxu0
    %v1712 = vadd.f32 %v1698, %v1711
    %1713 = vdwg.mxu0
    %v1714 = vmax.f32 %v1486, 0.0
    %v1715 = vmax.f32 %v1598, 0.0
    %v1716 = vmax.f32 %v1710, 0.0
    %v1717 = vmax.f32 %v1488, 0.0
    %v1718 = vmax.f32 %v1600, 0.0
    %v1719 = vmax.f32 %v1712, 0.0
    %v1720 = vpack.c.bf16 %v1717, %v1714
    %v1721 = vpack.c.bf16 %v1718, %v1715
    %v1722 = vpack.c.bf16 %v1719, %v1716
    %v1723 = vld [vmem:[%s3] sm:$0xf]
    %v1724 = vld [vmem:[%s3 + $0x4] sm:$0xf]
    %v1725 = vld [vmem:[%s3 + $0x8] sm:$0xf]
    %v1726 = vld [vmem:[%s3 + $0xc] sm:$0xf]
    %v1727 = vld [vmem:[%s3 + $0x10] sm:$0xf]
    %v1728 = vld [vmem:[%s3 + $0x14] sm:$0xf]
    %v1729 = vld [vmem:[%s3 + $0x18] sm:$0xf]
    %v1730 = vld [vmem:[%s3 + $0x1c] sm:$0xf]
    %v1731 = vld [vmem:[%s3 + $0x20] sm:$0xf]
    %v1732 = vld [vmem:[%s3 + $0x24] sm:$0xf]
    %v1733 = vld [vmem:[%s3 + $0x28] sm:$0xf]
    %v1734 = vld [vmem:[%s3 + $0x2c] sm:$0xf]
    %v1735 = vld [vmem:[%s3 + $0x30] sm:$0xf]
    %v1736 = vld [vmem:[%s3 + $0x34] sm:$0xf]
    %v1737 = vld [vmem:[%s3 + $0x38] sm:$0xf]
    %v1738 = vld [vmem:[%s3 + $0x3c] sm:$0xf]
    %v1739 = vld [vmem:[%s3 + $0x40] sm:$0xf]
    %v1740 = vld [vmem:[%s3 + $0x44] sm:$0xf]
    %v1741 = vld [vmem:[%s3 + $0x48] sm:$0xf]
    %v1742 = vld [vmem:[%s3 + $0x4c] sm:$0xf]
    %v1743 = vld [vmem:[%s3 + $0x50] sm:$0xf]
    %v1744 = vld [vmem:[%s3 + $0x54] sm:$0xf]
    %v1745 = vld [vmem:[%s3 + $0x58] sm:$0xf]
    %v1746 = vld [vmem:[%s3 + $0x5c] sm:$0xf]
    %v1747 = vld [vmem:[%s3 + $0x60] sm:$0xf]
    %v1748 = vld [vmem:[%s3 + $0x64] sm:$0xf]
    %v1749 = vld [vmem:[%s3 + $0x68] sm:$0xf]
    %v1750 = vld [vmem:[%s3 + $0x6c] sm:$0xf]
    %v1751 = vld [vmem:[%s3 + $0x70] sm:$0xf]
    %v1752 = vld [vmem:[%s3 + $0x74] sm:$0xf]
    %v1753 = vld [vmem:[%s3 + $0x78] sm:$0xf]
    %v1754 = vld [vmem:[%s3 + $0x7c] sm:$0xf]
    %v1755 = vld [vmem:[%s3 + $0x80] sm:$0xf]
    %v1756 = vld [vmem:[%s3 + $0x84] sm:$0xf]
    %v1757 = vld [vmem:[%s3 + $0x88] sm:$0xf]
    %v1758 = vld [vmem:[%s3 + $0x8c] sm:$0xf]
    %v1759 = vld [vmem:[%s3 + $0x90] sm:$0xf]
    %v1760 = vld [vmem:[%s3 + $0x94] sm:$0xf]
    %v1761 = vld [vmem:[%s3 + $0x98] sm:$0xf]
    %v1762 = vld [vmem:[%s3 + $0x9c] sm:$0xf]
    %v1763 = vld [vmem:[%s3 + $0xa0] sm:$0xf]
    %v1764 = vld [vmem:[%s3 + $0xa4] sm:$0xf]
    %v1765 = vld [vmem:[%s3 + $0xa8] sm:$0xf]
    %v1766 = vld [vmem:[%s3 + $0xac] sm:$0xf]
    %v1767 = vld [vmem:[%s3 + $0xb0] sm:$0xf]
    %v1768 = vld [vmem:[%s3 + $0xb4] sm:$0xf]
    %v1769 = vld [vmem:[%s3 + $0xb8] sm:$0xf]
    %v1770 = vld [vmem:[%s3 + $0xbc] sm:$0xf]
    %v1771 = vld [vmem:[%s4] sm:$0x1]
    %v1773 = vperm.slane %v1771, 0
    %v1823 = vunpack.c.l.b16 %v1723
    %v1824 = vunpack.c.l.b16 %v1724
    %v1825 = vunpack.c.l.b16 %v1725
    %v1826 = vunpack.c.l.b16 %v1726
    %v1827 = vunpack.c.l.b16 %v1727
    %v1828 = vunpack.c.l.b16 %v1728
    %v1829 = vunpack.c.l.b16 %v1729
    %v1830 = vunpack.c.l.b16 %v1730
    %v1831 = vunpack.c.l.b16 %v1731
    %v1832 = vunpack.c.l.b16 %v1732
    %v1833 = vunpack.c.l.b16 %v1733
    %v1834 = vunpack.c.l.b16 %v1734
    %v1835 = vunpack.c.l.b16 %v1735
    %v1836 = vunpack.c.l.b16 %v1736
    %v1837 = vunpack.c.l.b16 %v1737
    %v1838 = vunpack.c.l.b16 %v1738
    %v1839 = vunpack.c.l.b16 %v1739
    %v1840 = vunpack.c.l.b16 %v1740
    %v1841 = vunpack.c.l.b16 %v1741
    %v1842 = vunpack.c.l.b16 %v1742
    %v1843 = vunpack.c.l.b16 %v1743
    %v1844 = vunpack.c.l.b16 %v1744
    %v1845 = vunpack.c.l.b16 %v1745
    %v1846 = vunpack.c.l.b16 %v1746
    %v1847 = vunpack.c.l.b16 %v1747
    %v1848 = vunpack.c.l.b16 %v1748
    %v1849 = vunpack.c.l.b16 %v1749
    %v1850 = vunpack.c.l.b16 %v1750
    %v1851 = vunpack.c.l.b16 %v1751
    %v1852 = vunpack.c.l.b16 %v1752
    %v1853 = vunpack.c.l.b16 %v1753
    %v1854 = vunpack.c.l.b16 %v1754
    %v1855 = vunpack.c.l.b16 %v1755
    %v1856 = vunpack.c.l.b16 %v1756
    %v1857 = vunpack.c.l.b16 %v1757
    %v1858 = vunpack.c.l.b16 %v1758
    %v1859 = vunpack.c.l.b16 %v1759
    %v1860 = vunpack.c.l.b16 %v1760
    %v1861 = vunpack.c.l.b16 %v1761
    %v1862 = vunpack.c.l.b16 %v1762
    %v1863 = vunpack.c.l.b16 %v1763
    %v1864 = vunpack.c.l.b16 %v1764
    %v1865 = vunpack.c.l.b16 %v1765
    %v1866 = vunpack.c.l.b16 %v1766
    %v1867 = vunpack.c.l.b16 %v1767
    %v1868 = vunpack.c.l.b16 %v1768
    %v1869 = vunpack.c.l.b16 %v1769
    %v1870 = vunpack.c.l.b16 %v1770
    %v1871 = vpack.c.b16 %v1824, %v1823
    %v1872 = vpack.c.b16 %v1826, %v1825
    %v1873 = vpack.c.b16 %v1828, %v1827
    %v1874 = vpack.c.b16 %v1830, %v1829
    %v1875 = vpack.c.b16 %v1832, %v1831
    %v1876 = vpack.c.b16 %v1834, %v1833
    %v1877 = vpack.c.b16 %v1836, %v1835
    %v1878 = vpack.c.b16 %v1838, %v1837
    %v1879 = vpack.c.b16 %v1840, %v1839
    %v1880 = vpack.c.b16 %v1842, %v1841
    %v1881 = vpack.c.b16 %v1844, %v1843
    %v1882 = vpack.c.b16 %v1846, %v1845
    %v1883 = vpack.c.b16 %v1848, %v1847
    %v1884 = vpack.c.b16 %v1850, %v1849
    %v1885 = vpack.c.b16 %v1852, %v1851
    %v1886 = vpack.c.b16 %v1854, %v1853
    %v1887 = vpack.c.b16 %v1856, %v1855
    %v1888 = vpack.c.b16 %v1858, %v1857
    %v1889 = vpack.c.b16 %v1860, %v1859
    %v1890 = vpack.c.b16 %v1862, %v1861
    %v1891 = vpack.c.b16 %v1864, %v1863
    %v1892 = vpack.c.b16 %v1866, %v1865
    %v1893 = vpack.c.b16 %v1868, %v1867
    %v1894 = vpack.c.b16 %v1870, %v1869
    %1919 = vmatpush.bf16.msra.mxu0 %v1878
    %1920 = vmatpush.bf16.msra.mxu0 %v1877
    %1921 = vmatpush.bf16.msra.mxu0 %v1876
    %1922 = vmatpush.bf16.msra.mxu0 %v1875
    %1923 = vmatpush.bf16.msra.mxu0 %v1874
    %1924 = vmatpush.bf16.msra.mxu0 %v1873
    %1925 = vmatpush.bf16.msra.mxu0 %v1872
    %1926 = vmatpush.bf16.msra.mxu0 %v1871
    %1927 = vmatmul.bf16.gmra.mxu0 %v1720
    %v1928 = vpop.f32.mrf.mxu0
    %v1929 = vadd.f32 %v1773, %v1928
    %v1930 = vpop.f32.mrf.mxu0
    %v1931 = vadd.f32 %v1773, %v1930
    %1932 = vdwg.mxu0
    %1933 = vmatpush.bf16.msra.mxu0 %v1886
    %1934 = vmatpush.bf16.msra.mxu0 %v1885
    %1935 = vmatpush.bf16.msra.mxu0 %v1884
    %1936 = vmatpush.bf16.msra.mxu0 %v1883
    %1937 = vmatpush.bf16.msra.mxu0 %v1882
    %1938 = vmatpush.bf16.msra.mxu0 %v1881
    %1939 = vmatpush.bf16.msra.mxu0 %v1880
    %1940 = vmatpush.bf16.msra.mxu0 %v1879
    %1941 = vmatmul.bf16.gmra.mxu0 %v1721
    %v1942 = vpop.f32.mrf.mxu0
    %v1943 = vadd.f32 %v1929, %v1942
    %v1944 = vpop.f32.mrf.mxu0
    %v1945 = vadd.f32 %v1931, %v1944
    %1946 = vdwg.mxu0
    %1947 = vmatpush.bf16.msra.mxu0 %v1894
    %1948 = vmatpush.bf16.msra.mxu0 %v1893
    %1949 = vmatpush.bf16.msra.mxu0 %v1892
    %1950 = vmatpush.bf16.msra.mxu0 %v1891
    %1951 = vmatpush.bf16.msra.mxu0 %v1890
    %1952 = vmatpush.bf16.msra.mxu0 %v1889
    %1953 = vmatpush.bf16.msra.mxu0 %v1888
    %1954 = vmatpush.bf16.msra.mxu0 %v1887
    %1955 = vmatmul.bf16.gmra.mxu0 %v1722
    %v1956 = vpop.f32.mrf.mxu0
    %v1957 = vadd.f32 %v1943, %v1956
    %v1958 = vpop.f32.mrf.mxu0
    %v1959 = vadd.f32 %v1945, %v1958
    %1960 = vdwg.mxu0
    %v1961 = vmax.f32 %v1957, 0.0
    %v1962 = vmax.f32 %v1959, 0.0
    %v1963 = vpack.c.bf16 %v1962, %v1961
    %v1964 = vld [vmem:[%s5] sm:$0xf]
    %v1965 = vld [vmem:[%s5 + $0x4] sm:$0xf]
    %v1966 = vld [vmem:[%s5 + $0x8] sm:$0xf]
    %v1967 = vld [vmem:[%s5 + $0xc] sm:$0xf]
    %v1968 = vld [vmem:[%s5 + $0x10] sm:$0xf]
    %v1969 = vld [vmem:[%s5 + $0x14] sm:$0xf]
    %v1970 = vld [vmem:[%s5 + $0x18] sm:$0xf]
    %v1971 = vld [vmem:[%s5 + $0x1c] sm:$0xf]
    %v1972 = vld [vmem:[%s5 + $0x20] sm:$0xf]
    %v1973 = vld [vmem:[%s5 + $0x24] sm:$0xf]
    %v1974 = vld [vmem:[%s5 + $0x28] sm:$0xf]
    %v1975 = vld [vmem:[%s5 + $0x2c] sm:$0xf]
    %v1976 = vld [vmem:[%s5 + $0x30] sm:$0xf]
    %v1977 = vld [vmem:[%s5 + $0x34] sm:$0xf]
    %v1978 = vld [vmem:[%s5 + $0x38] sm:$0xf]
    %v1979 = vld [vmem:[%s5 + $0x3c] sm:$0xf]
    %v1980 = vld [vmem:[%s6] sm:$0x1]
    %v1982 = vperm.slane %v1980, 0
    %v2000 = vunpack.c.l.b16 %v1964
    %v2001 = vunpack.c.l.b16 %v1965
    %v2002 = vunpack.c.l.b16 %v1966
    %v2003 = vunpack.c.l.b16 %v1967
    %v2004 = vunpack.c.l.b16 %v1968
    %v2005 = vunpack.c.l.b16 %v1969
    %v2006 = vunpack.c.l.b16 %v1970
    %v2007 = vunpack.c.l.b16 %v1971
    %v2008 = vunpack.c.l.b16 %v1972
    %v2009 = vunpack.c.l.b16 %v1973
    %v2010 = vunpack.c.l.b16 %v1974
    %v2011 = vunpack.c.l.b16 %v1975
    %v2012 = vunpack.c.l.b16 %v1976
    %v2013 = vunpack.c.l.b16 %v1977
    %v2014 = vunpack.c.l.b16 %v1978
    %v2015 = vunpack.c.l.b16 %v1979
    %v2016 = vpack.c.b16 %v2001, %v2000
    %v2017 = vpack.c.b16 %v2003, %v2002
    %v2018 = vpack.c.b16 %v2005, %v2004
    %v2019 = vpack.c.b16 %v2007, %v2006
    %v2020 = vpack.c.b16 %v2009, %v2008
    %v2021 = vpack.c.b16 %v2011, %v2010
    %v2022 = vpack.c.b16 %v2013, %v2012
    %v2023 = vpack.c.b16 %v2015, %v2014
    %2032 = vmatpush.bf16.msra.mxu0 %v2023
    %2033 = vmatpush.bf16.msra.mxu0 %v2022
    %2034 = vmatpush.bf16.msra.mxu0 %v2021
    %2035 = vmatpush.bf16.msra.mxu0 %v2020
    %2036 = vmatpush.bf16.msra.mxu0 %v2019
    %2037 = vmatpush.bf16.msra.mxu0 %v2018
    %2038 = vmatpush.bf16.msra.mxu0 %v2017
    %2039 = vmatpush.bf16.msra.mxu0 %v2016
    %2040 = vmatmul.bf16.gmra.mxu0 %v1963
    %v2041 = vpop.f32.mrf.mxu0
    %v2042 = vadd.f32 %v1982, %v2041
    %v2043 = vpop.f32.mrf.mxu0
    %v2044 = vadd.f32 %v1982, %v2043
    %2045 = vdwg.mxu0
    %v2046 = vlaneseq
    %v2047 = vand.u32 %v2046, 127
    %vm2048 = vcmp.lt.s32.totalorder %v2047, 10
    %v2049 = vsel %vm2048, %v2042, -1e+30
    %v2050 = vsel %vm2048, %v2044, -1e+30
    %2051 = vmax.xlane.f32.xlu0 %v2049
    %v2052 = vpop.xlane.xlu0 %2051
    %2053 = vmax.xlane.f32.xlu0 %v2050
    %v2054 = vpop.xlane.xlu0 %2053
    %v2055 = vsub.f32 %v2049, %v2052
    %v2056 = vsub.f32 %v2050, %v2054
    %v2057 = vmul.f32 %v2055, 1.442695
    %v2058 = vpow.pop %v2057
    %v2059 = vmul.f32 %v2056, 1.442695
    %v2060 = vpow.pop %v2059
    %2061 = vadd.xlane.f32.xlu0 %v2058
    %v2062 = vpop.xlane.xlu0 %2061
    %2063 = vadd.xlane.f32.xlu0 %v2060
    %v2064 = vpop.xlane.xlu0 %2063
    %v2065 = vlog2.pop %v2062
    %v2066 = vmul.f32 %v2065, 0.6931472
    %v2067 = vlog2.pop %v2064
    %v2068 = vmul.f32 %v2067, 0.6931472
    %v2069 = vsub.f32 %v2055, %v2066
    %v2070 = vsub.f32 %v2056, %v2068
    %2071 = vst [vmem:[%s7] sm:$0xff] %v2069
    %2072 = vst [vmem:[%s7 + $0x8] sm:$0xff] %v2070
    // Predicated region
    $region34: #{fc_forward.1} parent=1 // pred_check
      _
    $region35: #{fc_forward.1} parent=1 // pred_check_branch
      %2074 = sbr.rel (0) target = $region37
    $region36: #{fc_forward.1} parent=1 // pred_region
      _
    $region37: #{fc_forward.1} parent=1 // pred_fallthru
      _
    // Predicated region
    $region38: #{fc_forward.1} parent=1 // pred_check
      _
    $region39: #{fc_forward.1} parent=1 // pred_check_branch
      %2076 = sbr.rel (0) target = $region41
    $region40: #{fc_forward.1} parent=1 // pred_region
      _
    $region41: #{fc_forward.1} parent=1 // pred_fallthru
      _
    %2077 = vsyncpa [#allocation3], 1

</llo_original>
